<compile_context>
chip_gen: v7x
topology: tpu7x:2x2x1
jax: 0.10.0
libtpu: 0.0.40
codegen_flags: <defaults>
</compile_context>

<pallas_src>
from functools import partial

import jax
import jax.numpy as jnp
from jax import lax
from jax.experimental import pallas as pl
from jax.experimental.pallas import tpu as pltpu

EEG_DIM = 60   # AttentionLayer first arg
NEO_DIM = 10   # AttentionLayer second arg


# ----------------------------- fused kernel ---------------------------------
def _mental_kernel(
    neo_ref, eeg_ref, h0_ref,
    wq_ref, bq_ref, wkv_ref, bkv_ref,
    wih_ref, bi_ref, whh_ref, bh_ref,
    wfc_ref, bfc_ref,
    y_ref, hout_ref):
    Bb, H = h0_ref.shape
    rows_k, E = eeg_ref.shape
    rows_q = neo_ref.shape[0]
    Sq = rows_q // Bb
    Sk = rows_k // Bb

    # -------- attention: whole batch folded into the matmul row dimension ---
    q2 = jnp.dot(neo_ref[...], wq_ref[...],
                 preferred_element_type=jnp.float32) + bq_ref[...]    # (Bb*Sq, E)
    kv2 = jnp.dot(eeg_ref[...], wkv_ref[...],
                  preferred_element_type=jnp.float32) + bkv_ref[...]  # (Bb*Sk, 2E)
    Q = q2.reshape(Bb, Sq, E)
    K = kv2[:, :E].reshape(Bb, Sk, E)
    V = kv2[:, E:].reshape(Bb, Sk, E)

    scores = jnp.einsum("bqe,bke->bqk", Q, K,
                        preferred_element_type=jnp.float32) * (1.0 / (E ** 0.5))
    m = jnp.max(scores, axis=-1, keepdims=True)
    p = jnp.exp(scores - m)
    denom = jnp.sum(p, axis=-1, keepdims=True)
    attn = p * pl.reciprocal(denom, approx=False)      # exact; denom is tiny
    ctx = jnp.einsum("bqk,bke->bqe", attn, V,
                     preferred_element_type=jnp.float32)              # (Bb,Sq,E)
    # attention weights are intentionally not written back (caller drops them)

    # -------- GRU: packed hoisted input projection (one (E,3H) matmul) ------
    x_tm = pltpu.einshape("bqe->qbe", ctx).reshape(Sq * Bb, E)        # time-major
    gi = (jnp.dot(x_tm, wih_ref[...],
                  preferred_element_type=jnp.float32)
          + bi_ref[...]).reshape(Sq, Bb, 3 * H)                       # r|z|n packed

    whh = whh_ref[...]          # (H, 3H)  fused r|z|n hidden weights
    bh = bh_ref[...]            # (1, 3H)  == [0 | 0 | b_hn]

    # Fully unrolled recurrence (Sq small & static): one fused (Bb,H)x(H,3H)
    # MXU push per step, everything stays in vregs, no per-step scratch stores.
    h = h0_ref[...]
    hs = []
    for t in range(Sq):
        gh = jnp.dot(h, whh, preferred_element_type=jnp.float32) + bh  # (Bb,3H)
        gi_t = gi[t]                                                   # (Bb,3H)
        r = jax.nn.sigmoid(gi_t[:, :H] + gh[:, :H])
        z = jax.nn.sigmoid(gi_t[:, H:2 * H] + gh[:, H:2 * H])
        n = jnp.tanh(gi_t[:, 2 * H:] + r * gh[:, 2 * H:])
        h = (1.0 - z) * n + z * h
        hs.append(h)
    hout_ref[...] = h

    # fc head applied once over all (batch, time) rows; single batch-major store.
    hs_tm = jnp.stack(hs, axis=0)                                      # (Sq,Bb,H)
    hs_bm = pltpu.einshape("qbh->bqh", hs_tm).reshape(Bb * Sq, H)
    y_ref[...] = (jnp.dot(hs_bm, wfc_ref[...],
                          preferred_element_type=jnp.float32) + bfc_ref[...])


# ----------------------------- one-time weight packing -----------------------
def pack_params(params):
    """One-time repack of PyTorch-layout weights into the kernel layout.

    Expects linear weights already transposed to (in, out):
      wq (10,60)  bq (1,60)   wk/wv (60,60)  bk/bv (1,60)
      wih (60,3H) bih (1,3H)  whh (H,3H)     bhh (1,3H)   gate order r|z|n
      wfc (H,O)   bfc (1,O)
    """
    H = params["whh"].shape[0]
    wkv = jnp.concatenate([params["wk"], params["wv"]], axis=1)       # (60, 120)
    bkv = jnp.concatenate([params["bk"], params["bv"]], axis=1)       # (1, 120)
    bih, bhh = params["bih"], params["bhh"]
    # b_hr / b_hz are additive outside the nonlinearity -> fold into the
    # input-side bias; b_hn must stay on the hidden side (inside r * (.)).
    bi = jnp.concatenate([bih[:, :2 * H] + bhh[:, :2 * H], bih[:, 2 * H:]], axis=1)
    bh = jnp.concatenate([jnp.zeros_like(bhh[:, :2 * H]), bhh[:, 2 * H:]], axis=1)
    return dict(wq=params["wq"], bq=params["bq"], wkv=wkv, bkv=bkv,
                wih=params["wih"], bi=bi, whh=params["whh"], bh=bh,
                wfc=params["wfc"], bfc=params["bfc"])


# ----------------------------- forward wrapper --------------------------------
@partial(jax.jit, static_argnames=("num_batch_blocks",))
def mental_forward(eeg, neo, h, packed, num_batch_blocks=1):
    B, Sq, I = neo.shape
    _, Sk, E = eeg.shape
    H = packed["whh"].shape[0]
    O = packed["wfc"].shape[-1]
    nb = num_batch_blocks            # >1 only useful on v7x (2 TCs) and only if
    assert B % nb == 0               # (B//nb)*Sq, (B//nb)*Sk are multiples of 8
    Bb = B // nb

    neo2 = neo.reshape(B * Sq, I)    # flat batch-major rows; DMA'd already flat
    eeg2 = eeg.reshape(B * Sk, E)
    h0 = h[0]

    # Advisory cost hint so XLA overlaps surrounding HLOs with the custom call.
    flops = 2 * B * (Sq * I * E + Sk * E * 2 * E + 2 * Sq * Sk * E
                     + Sq * E * 3 * H + Sq * H * 3 * H + Sq * H * O)
    transcendentals = B * Sq * (Sk + 3 * H)
    bytes_accessed = 4 * (int(neo2.size) + int(eeg2.size) + int(h0.size)
                          + B * Sq * O + B * H
                          + sum(int(v.size) for v in packed.values()))

    full = lambda a: pl.BlockSpec(a.shape, lambda i: (0, 0))   # replicated weights

    y2, h_out = pl.pallas_call(
        _mental_kernel,
        out_shape=[
            jax.ShapeDtypeStruct((B * Sq, O), jnp.float32),    # batch-major y rows
            jax.ShapeDtypeStruct((B, H), jnp.float32),         # final hidden state
        ],
        grid_spec=pltpu.PrefetchScalarGridSpec(
            num_scalar_prefetch=0,
            grid=(nb,),
            in_specs=[
                pl.BlockSpec((Bb * Sq, I), lambda i: (i, 0)),
                pl.BlockSpec((Bb * Sk, E), lambda i: (i, 0)),
                pl.BlockSpec((Bb, H), lambda i: (i, 0)),
                full(packed["wq"]), full(packed["bq"]),
                full(packed["wkv"]), full(packed["bkv"]),
                full(packed["wih"]), full(packed["bi"]),
                full(packed["whh"]), full(packed["bh"]),
                full(packed["wfc"]), full(packed["bfc"]),
            ],
            out_specs=[
                pl.BlockSpec((Bb * Sq, O), lambda i: (i, 0)),
                pl.BlockSpec((Bb, H), lambda i: (i, 0)),
            ],
        ),
        compiler_params=pltpu.CompilerParams(
            dimension_semantics=("parallel",)),
        cost_estimate=pl.CostEstimate(
            flops=flops, transcendentals=transcendentals,
            bytes_accessed=bytes_accessed),
    )(neo2, eeg2, h0,
      packed["wq"], packed["bq"], packed["wkv"], packed["bkv"],
      packed["wih"], packed["bi"], packed["whh"], packed["bh"],
      packed["wfc"], packed["bfc"])

    return y2.reshape(B, Sq, O), h_out[None]      # h: (1, B, H) like PyTorch


# ----------------------------- pure-JAX reference ----------------------------
def mental_reference(eeg, neo, h, params):
    Q = jnp.einsum("bqi,io->bqo", neo, params["wq"]) + params["bq"]
    K = jnp.einsum("bki,io->bko", eeg, params["wk"]) + params["bk"]
    V = jnp.einsum("bki,io->bko", eeg, params["wv"]) + params["bv"]
    s = jnp.einsum("bqe,bke->bqk", Q, K) / jnp.sqrt(jnp.float32(EEG_DIM))
    a = jax.nn.softmax(s, axis=-1)
    ctx = jnp.einsum("bqk,bke->bqe", a, V)
    H = params["whh"].shape[0]
    h_t = h[0]
    ys = []
    for t in range(ctx.shape[1]):
        x_t = ctx[:, t, :]
        gi = x_t @ params["wih"] + params["bih"]
        gh = h_t @ params["whh"] + params["bhh"]
        r = jax.nn.sigmoid(gi[:, :H] + gh[:, :H])
        z = jax.nn.sigmoid(gi[:, H:2 * H] + gh[:, H:2 * H])
        n = jnp.tanh(gi[:, 2 * H:] + r * gh[:, 2 * H:])
        h_t = (1.0 - z) * n + z * h_t
        ys.append(h_t @ params["wfc"] + params["bfc"])
    return jnp.stack(ys, axis=1), h_t[None]


# ----------------------------- demo / test -----------------------------------
if __name__ == "__main__":
    key = jax.random.PRNGKey(0)
    B, Sk, Sq = 2, 8, 4          # batch, EEG seq len, NEO seq len (GRU steps)
    H, O = 32, 4                 # hidden_size, output_size
    keys = jax.random.split(key, 16)

    def init(k, shape, scale=0.1):
        return jax.random.normal(k, shape, dtype=jnp.float32) * scale

    params = dict(
        wq=init(keys[0], (NEO_DIM, EEG_DIM)), bq=init(keys[1], (1, EEG_DIM)),
        wk=init(keys[2], (EEG_DIM, EEG_DIM)), bk=init(keys[3], (1, EEG_DIM)),
        wv=init(keys[4], (EEG_DIM, EEG_DIM)), bv=init(keys[5], (1, EEG_DIM)),
        wih=init(keys[6], (EEG_DIM, 3 * H)), bih=init(keys[7], (1, 3 * H)),
        whh=init(keys[8], (H, 3 * H)), bhh=init(keys[9], (1, 3 * H)),
        wfc=init(keys[10], (H, O)), bfc=init(keys[11], (1, O)),
    )

    eeg = jax.random.normal(keys[12], (B, Sk, EEG_DIM), dtype=jnp.float32)
    neo = jax.random.normal(keys[13], (B, Sq, NEO_DIM), dtype=jnp.float32)
    h0 = jax.random.normal(keys[14], (1, B, H), dtype=jnp.float32)

    packed = pack_params(params)      # one-time weight repack, outside the jit

    y, h_new = mental_forward(eeg, neo, h0, packed)
    jax.block_until_ready((y, h_new))

    y_ref, h_ref = mental_reference(eeg, neo, h0, params)
    assert y.shape == (B, Sq, O) and h_new.shape == (1, B, H)
    assert bool(jnp.allclose(y, y_ref, atol=3e-2, rtol=3e-2))
    assert bool(jnp.allclose(h_new, h_ref, atol=3e-2, rtol=3e-2))
    print("KERNEL_OK")
</pallas_src>

<mosaic_0001>
module attributes {stable_mosaic.version = 11 : i64} {
  func.func @_mental_kernel(%arg0: i32, %arg1: memref<8x10xf32, #tpu.memory_space<vmem>>, %arg2: memref<16x60xf32, #tpu.memory_space<vmem>>, %arg3: memref<2x32xf32, #tpu.memory_space<vmem>>, %arg4: memref<10x60xf32, #tpu.memory_space<vmem>>, %arg5: memref<1x60xf32, #tpu.memory_space<vmem>>, %arg6: memref<60x120xf32, #tpu.memory_space<vmem>>, %arg7: memref<1x120xf32, #tpu.memory_space<vmem>>, %arg8: memref<60x96xf32, #tpu.memory_space<vmem>>, %arg9: memref<1x96xf32, #tpu.memory_space<vmem>>, %arg10: memref<32x96xf32, #tpu.memory_space<vmem>>, %arg11: memref<1x96xf32, #tpu.memory_space<vmem>>, %arg12: memref<32x4xf32, #tpu.memory_space<vmem>>, %arg13: memref<1x4xf32, #tpu.memory_space<vmem>>, %arg14: memref<8x4xf32, #tpu.memory_space<vmem>>, %arg15: memref<2x32xf32, #tpu.memory_space<vmem>>) attributes {dimension_semantics = [#tpu.dimension_semantics<parallel>], iteration_bounds = array<i64: 1>, scalar_prefetch = 0 : i64, scratch_operands = 0 : i64, tpu.core_type = #tpu.core_type<tc>, window_params = [{transform_indices = @transform_0, window_bounds = array<i64: 8, 10>}, {transform_indices = @transform_1, window_bounds = array<i64: 16, 60>}, {transform_indices = @transform_2, window_bounds = array<i64: 2, 32>}, {pipeline_mode = #tpu.pipeline_mode<synchronous>, transform_indices = @transform_3, window_bounds = array<i64: 10, 60>}, {pipeline_mode = #tpu.pipeline_mode<synchronous>, transform_indices = @transform_4, window_bounds = array<i64: 1, 60>}, {pipeline_mode = #tpu.pipeline_mode<synchronous>, transform_indices = @transform_5, window_bounds = array<i64: 60, 120>}, {pipeline_mode = #tpu.pipeline_mode<synchronous>, transform_indices = @transform_6, window_bounds = array<i64: 1, 120>}, {pipeline_mode = #tpu.pipeline_mode<synchronous>, transform_indices = @transform_7, window_bounds = array<i64: 60, 96>}, {pipeline_mode = #tpu.pipeline_mode<synchronous>, transform_indices = @transform_8, window_bounds = array<i64: 1, 96>}, {pipeline_mode = #tpu.pipeline_mode<synchronous>, transform_indices = @transform_9, window_bounds = array<i64: 32, 96>}, {pipeline_mode = #tpu.pipeline_mode<synchronous>, transform_indices = @transform_10, window_bounds = array<i64: 1, 96>}, {pipeline_mode = #tpu.pipeline_mode<synchronous>, transform_indices = @transform_11, window_bounds = array<i64: 32, 4>}, {pipeline_mode = #tpu.pipeline_mode<synchronous>, transform_indices = @transform_12, window_bounds = array<i64: 1, 4>}, {transform_indices = @transform_13, window_bounds = array<i64: 8, 4>}, {transform_indices = @transform_14, window_bounds = array<i64: 2, 32>}]} {
    %c0 = arith.constant 0 : index
    %c0_0 = arith.constant 0 : index
    %0 = vector.load %arg1[%c0, %c0_0] : memref<8x10xf32, #tpu.memory_space<vmem>>, vector<8x10xf32>
    %c0_1 = arith.constant 0 : index
    %c0_2 = arith.constant 0 : index
    %1 = vector.load %arg4[%c0_1, %c0_2] : memref<10x60xf32, #tpu.memory_space<vmem>>, vector<10x60xf32>
    %cst = arith.constant dense<0.000000e+00> : vector<8x60xf32>
    %2 = tpu.matmul %0, %1, %cst {dimension_numbers = #tpu.dot_dimension_numbers<[1], [0], [0], [1], [0, 0, 1, 1], [], []>} : vector<8x10xf32>, vector<10x60xf32>, vector<8x60xf32> -> vector<8x60xf32>
    %c0_3 = arith.constant 0 : index
    %c0_4 = arith.constant 0 : index
    %3 = vector.load %arg5[%c0_3, %c0_4] : memref<1x60xf32, #tpu.memory_space<vmem>>, vector<1x60xf32>
    %4 = vector.broadcast %3 : vector<1x60xf32> to vector<8x60xf32>
    %5 = arith.addf %2, %4 : vector<8x60xf32>
    %c0_5 = arith.constant 0 : index
    %c0_6 = arith.constant 0 : index
    %6 = vector.load %arg2[%c0_5, %c0_6] : memref<16x60xf32, #tpu.memory_space<vmem>>, vector<16x60xf32>
    %c0_7 = arith.constant 0 : index
    %c0_8 = arith.constant 0 : index
    %7 = vector.load %arg6[%c0_7, %c0_8] : memref<60x120xf32, #tpu.memory_space<vmem>>, vector<60x120xf32>
    %cst_9 = arith.constant dense<0.000000e+00> : vector<16x120xf32>
    %8 = tpu.matmul %6, %7, %cst_9 {dimension_numbers = #tpu.dot_dimension_numbers<[1], [0], [0], [1], [0, 0, 1, 1], [], []>} : vector<16x60xf32>, vector<60x120xf32>, vector<16x120xf32> -> vector<16x120xf32>
    %c0_10 = arith.constant 0 : index
    %c0_11 = arith.constant 0 : index
    %9 = vector.load %arg7[%c0_10, %c0_11] : memref<1x120xf32, #tpu.memory_space<vmem>>, vector<1x120xf32>
    %10 = vector.broadcast %9 : vector<1x120xf32> to vector<16x120xf32>
    %11 = arith.addf %8, %10 : vector<16x120xf32>
    %12 = vector.shape_cast %5 : vector<8x60xf32> to vector<2x4x60xf32>
    %13 = vector.extract_strided_slice %11 {offsets = [0, 0], sizes = [16, 60], strides = [1, 1]} : vector<16x120xf32> to vector<16x60xf32>
    %14 = vector.shape_cast %13 : vector<16x60xf32> to vector<2x8x60xf32>
    %15 = vector.extract_strided_slice %11 {offsets = [0, 60], sizes = [16, 60], strides = [1, 1]} : vector<16x120xf32> to vector<16x60xf32>
    %16 = vector.shape_cast %15 : vector<16x60xf32> to vector<2x8x60xf32>
    "tpu.trace_start"() <{level = 10 : i32, message = "bqe,bke->bqk"}> : () -> ()
    %cst_12 = arith.constant dense<0.000000e+00> : vector<2x4x8xf32>
    %17 = tpu.matmul %12, %14, %cst_12 {dimension_numbers = #tpu.dot_dimension_numbers<[2], [2], [1], [1], [0, 0, 0, 1, 1, 1], [0], [0]>} : vector<2x4x60xf32>, vector<2x8x60xf32>, vector<2x4x8xf32> -> vector<2x4x8xf32>
    "tpu.trace_stop"() : () -> ()
    %cst_13 = arith.constant 0.129099444 : f32
    %18 = vector.broadcast %cst_13 : f32 to vector<2x4x8xf32>
    %19 = arith.mulf %17, %18 : vector<2x4x8xf32>
    %cst_14 = arith.constant dense<0xFF800000> : vector<2x4xf32>
    %20 = vector.multi_reduction <maximumf>, %19, %cst_14 [2] : vector<2x4x8xf32> to vector<2x4xf32>
    %21 = vector.shape_cast %20 : vector<2x4xf32> to vector<2x4x1xf32>
    %22 = vector.broadcast %21 : vector<2x4x1xf32> to vector<2x4x8xf32>
    %23 = arith.subf %19, %22 : vector<2x4x8xf32>
    %24 = math.exp %23 : vector<2x4x8xf32>
    %cst_15 = arith.constant dense<0.000000e+00> : vector<2x4xf32>
    %25 = vector.multi_reduction <add>, %24, %cst_15 [2] : vector<2x4x8xf32> to vector<2x4xf32>
    %26 = vector.shape_cast %25 : vector<2x4xf32> to vector<2x4x1xf32>
    %27 = tpu.reciprocal %26 : vector<2x4x1xf32> -> vector<2x4x1xf32>
    %28 = vector.broadcast %27 : vector<2x4x1xf32> to vector<2x4x8xf32>
    %29 = arith.mulf %24, %28 : vector<2x4x8xf32>
    "tpu.trace_start"() <{level = 10 : i32, message = "bqk,bke->bqe"}> : () -> ()
    %cst_16 = arith.constant dense<0.000000e+00> : vector<2x4x60xf32>
    %30 = tpu.matmul %29, %16, %cst_16 {dimension_numbers = #tpu.dot_dimension_numbers<[2], [1], [1], [2], [0, 0, 0, 1, 1, 2], [0], [0]>} : vector<2x4x8xf32>, vector<2x8x60xf32>, vector<2x4x60xf32> -> vector<2x4x60xf32>
    "tpu.trace_stop"() : () -> ()
    %31 = tpu.transpose %30, [1, 0, 2] : vector<2x4x60xf32> -> vector<4x2x60xf32>
    %32 = vector.shape_cast %31 : vector<4x2x60xf32> to vector<8x60xf32>
    %c0_17 = arith.constant 0 : index
    %c0_18 = arith.constant 0 : index
    %33 = vector.load %arg8[%c0_17, %c0_18] : memref<60x96xf32, #tpu.memory_space<vmem>>, vector<60x96xf32>
    %cst_19 = arith.constant dense<0.000000e+00> : vector<8x96xf32>
    %34 = tpu.matmul %32, %33, %cst_19 {dimension_numbers = #tpu.dot_dimension_numbers<[1], [0], [0], [1], [0, 0, 1, 1], [], []>} : vector<8x60xf32>, vector<60x96xf32>, vector<8x96xf32> -> vector<8x96xf32>
    %c0_20 = arith.constant 0 : index
    %c0_21 = arith.constant 0 : index
    %35 = vector.load %arg9[%c0_20, %c0_21] : memref<1x96xf32, #tpu.memory_space<vmem>>, vector<1x96xf32>
    %36 = vector.broadcast %35 : vector<1x96xf32> to vector<8x96xf32>
    %37 = arith.addf %34, %36 : vector<8x96xf32>
    %38 = vector.shape_cast %37 : vector<8x96xf32> to vector<4x2x96xf32>
    %c0_22 = arith.constant 0 : index
    %c0_23 = arith.constant 0 : index
    %39 = vector.load %arg10[%c0_22, %c0_23] : memref<32x96xf32, #tpu.memory_space<vmem>>, vector<32x96xf32>
    %c0_24 = arith.constant 0 : index
    %c0_25 = arith.constant 0 : index
    %40 = vector.load %arg11[%c0_24, %c0_25] : memref<1x96xf32, #tpu.memory_space<vmem>>, vector<1x96xf32>
    %c0_26 = arith.constant 0 : index
    %c0_27 = arith.constant 0 : index
    %41 = vector.load %arg3[%c0_26, %c0_27] : memref<2x32xf32, #tpu.memory_space<vmem>>, vector<2x32xf32>
    %cst_28 = arith.constant dense<0.000000e+00> : vector<2x96xf32>
    %42 = tpu.matmul %41, %39, %cst_28 {dimension_numbers = #tpu.dot_dimension_numbers<[1], [0], [0], [1], [0, 0, 1, 1], [], []>} : vector<2x32xf32>, vector<32x96xf32>, vector<2x96xf32> -> vector<2x96xf32>
    %43 = vector.broadcast %40 : vector<1x96xf32> to vector<2x96xf32>
    %44 = arith.addf %42, %43 : vector<2x96xf32>
    %45 = vector.extract_strided_slice %38 {offsets = [0, 0, 0], sizes = [1, 2, 96], strides = [1, 1, 1]} : vector<4x2x96xf32> to vector<1x2x96xf32>
    %46 = vector.shape_cast %45 : vector<1x2x96xf32> to vector<2x96xf32>
    %47 = vector.extract_strided_slice %46 {offsets = [0, 0], sizes = [2, 32], strides = [1, 1]} : vector<2x96xf32> to vector<2x32xf32>
    %48 = vector.extract_strided_slice %44 {offsets = [0, 0], sizes = [2, 32], strides = [1, 1]} : vector<2x96xf32> to vector<2x32xf32>
    %49 = arith.addf %47, %48 : vector<2x32xf32>
    %50 = arith.negf %49 : vector<2x32xf32>
    %51 = math.exp %50 : vector<2x32xf32>
    %cst_29 = arith.constant 1.000000e+00 : f32
    %52 = vector.broadcast %cst_29 : f32 to vector<2x32xf32>
    %53 = arith.addf %52, %51 : vector<2x32xf32>
    %54 = arith.divf %52, %53 : vector<2x32xf32>
    %55 = vector.extract_strided_slice %46 {offsets = [0, 32], sizes = [2, 32], strides = [1, 1]} : vector<2x96xf32> to vector<2x32xf32>
    %56 = vector.extract_strided_slice %44 {offsets = [0, 32], sizes = [2, 32], strides = [1, 1]} : vector<2x96xf32> to vector<2x32xf32>
    %57 = arith.addf %55, %56 : vector<2x32xf32>
    %58 = arith.negf %57 : vector<2x32xf32>
    %59 = math.exp %58 : vector<2x32xf32>
    %cst_30 = arith.constant 1.000000e+00 : f32
    %60 = vector.broadcast %cst_30 : f32 to vector<2x32xf32>
    %61 = arith.addf %60, %59 : vector<2x32xf32>
    %62 = arith.divf %60, %61 : vector<2x32xf32>
    %63 = vector.extract_strided_slice %46 {offsets = [0, 64], sizes = [2, 32], strides = [1, 1]} : vector<2x96xf32> to vector<2x32xf32>
    %64 = vector.extract_strided_slice %44 {offsets = [0, 64], sizes = [2, 32], strides = [1, 1]} : vector<2x96xf32> to vector<2x32xf32>
    %65 = arith.mulf %54, %64 : vector<2x32xf32>
    %66 = arith.addf %63, %65 : vector<2x32xf32>
    %67 = math.tanh %66 : vector<2x32xf32>
    %cst_31 = arith.constant 1.000000e+00 : f32
    %68 = vector.broadcast %cst_31 : f32 to vector<2x32xf32>
    %69 = arith.subf %68, %62 : vector<2x32xf32>
    %70 = arith.mulf %69, %67 : vector<2x32xf32>
    %71 = arith.mulf %62, %41 : vector<2x32xf32>
    %72 = arith.addf %70, %71 : vector<2x32xf32>
    %cst_32 = arith.constant dense<0.000000e+00> : vector<2x96xf32>
    %73 = tpu.matmul %72, %39, %cst_32 {dimension_numbers = #tpu.dot_dimension_numbers<[1], [0], [0], [1], [0, 0, 1, 1], [], []>} : vector<2x32xf32>, vector<32x96xf32>, vector<2x96xf32> -> vector<2x96xf32>
    %74 = vector.broadcast %40 : vector<1x96xf32> to vector<2x96xf32>
    %75 = arith.addf %73, %74 : vector<2x96xf32>
    %76 = vector.extract_strided_slice %38 {offsets = [1, 0, 0], sizes = [1, 2, 96], strides = [1, 1, 1]} : vector<4x2x96xf32> to vector<1x2x96xf32>
    %77 = vector.shape_cast %76 : vector<1x2x96xf32> to vector<2x96xf32>
    %78 = vector.extract_strided_slice %77 {offsets = [0, 0], sizes = [2, 32], strides = [1, 1]} : vector<2x96xf32> to vector<2x32xf32>
    %79 = vector.extract_strided_slice %75 {offsets = [0, 0], sizes = [2, 32], strides = [1, 1]} : vector<2x96xf32> to vector<2x32xf32>
    %80 = arith.addf %78, %79 : vector<2x32xf32>
    %81 = arith.negf %80 : vector<2x32xf32>
    %82 = math.exp %81 : vector<2x32xf32>
    %cst_33 = arith.constant 1.000000e+00 : f32
    %83 = vector.broadcast %cst_33 : f32 to vector<2x32xf32>
    %84 = arith.addf %83, %82 : vector<2x32xf32>
    %85 = arith.divf %83, %84 : vector<2x32xf32>
    %86 = vector.extract_strided_slice %77 {offsets = [0, 32], sizes = [2, 32], strides = [1, 1]} : vector<2x96xf32> to vector<2x32xf32>
    %87 = vector.extract_strided_slice %75 {offsets = [0, 32], sizes = [2, 32], strides = [1, 1]} : vector<2x96xf32> to vector<2x32xf32>
    %88 = arith.addf %86, %87 : vector<2x32xf32>
    %89 = arith.negf %88 : vector<2x32xf32>
    %90 = math.exp %89 : vector<2x32xf32>
    %cst_34 = arith.constant 1.000000e+00 : f32
    %91 = vector.broadcast %cst_34 : f32 to vector<2x32xf32>
    %92 = arith.addf %91, %90 : vector<2x32xf32>
    %93 = arith.divf %91, %92 : vector<2x32xf32>
    %94 = vector.extract_strided_slice %77 {offsets = [0, 64], sizes = [2, 32], strides = [1, 1]} : vector<2x96xf32> to vector<2x32xf32>
    %95 = vector.extract_strided_slice %75 {offsets = [0, 64], sizes = [2, 32], strides = [1, 1]} : vector<2x96xf32> to vector<2x32xf32>
    %96 = arith.mulf %85, %95 : vector<2x32xf32>
    %97 = arith.addf %94, %96 : vector<2x32xf32>
    %98 = math.tanh %97 : vector<2x32xf32>
    %cst_35 = arith.constant 1.000000e+00 : f32
    %99 = vector.broadcast %cst_35 : f32 to vector<2x32xf32>
    %100 = arith.subf %99, %93 : vector<2x32xf32>
    %101 = arith.mulf %100, %98 : vector<2x32xf32>
    %102 = arith.mulf %93, %72 : vector<2x32xf32>
    %103 = arith.addf %101, %102 : vector<2x32xf32>
    %cst_36 = arith.constant dense<0.000000e+00> : vector<2x96xf32>
    %104 = tpu.matmul %103, %39, %cst_36 {dimension_numbers = #tpu.dot_dimension_numbers<[1], [0], [0], [1], [0, 0, 1, 1], [], []>} : vector<2x32xf32>, vector<32x96xf32>, vector<2x96xf32> -> vector<2x96xf32>
    %105 = vector.broadcast %40 : vector<1x96xf32> to vector<2x96xf32>
    %106 = arith.addf %104, %105 : vector<2x96xf32>
    %107 = vector.extract_strided_slice %38 {offsets = [2, 0, 0], sizes = [1, 2, 96], strides = [1, 1, 1]} : vector<4x2x96xf32> to vector<1x2x96xf32>
    %108 = vector.shape_cast %107 : vector<1x2x96xf32> to vector<2x96xf32>
    %109 = vector.extract_strided_slice %108 {offsets = [0, 0], sizes = [2, 32], strides = [1, 1]} : vector<2x96xf32> to vector<2x32xf32>
    %110 = vector.extract_strided_slice %106 {offsets = [0, 0], sizes = [2, 32], strides = [1, 1]} : vector<2x96xf32> to vector<2x32xf32>
    %111 = arith.addf %109, %110 : vector<2x32xf32>
    %112 = arith.negf %111 : vector<2x32xf32>
    %113 = math.exp %112 : vector<2x32xf32>
    %cst_37 = arith.constant 1.000000e+00 : f32
    %114 = vector.broadcast %cst_37 : f32 to vector<2x32xf32>
    %115 = arith.addf %114, %113 : vector<2x32xf32>
    %116 = arith.divf %114, %115 : vector<2x32xf32>
    %117 = vector.extract_strided_slice %108 {offsets = [0, 32], sizes = [2, 32], strides = [1, 1]} : vector<2x96xf32> to vector<2x32xf32>
    %118 = vector.extract_strided_slice %106 {offsets = [0, 32], sizes = [2, 32], strides = [1, 1]} : vector<2x96xf32> to vector<2x32xf32>
    %119 = arith.addf %117, %118 : vector<2x32xf32>
    %120 = arith.negf %119 : vector<2x32xf32>
    %121 = math.exp %120 : vector<2x32xf32>
    %cst_38 = arith.constant 1.000000e+00 : f32
    %122 = vector.broadcast %cst_38 : f32 to vector<2x32xf32>
    %123 = arith.addf %122, %121 : vector<2x32xf32>
    %124 = arith.divf %122, %123 : vector<2x32xf32>
    %125 = vector.extract_strided_slice %108 {offsets = [0, 64], sizes = [2, 32], strides = [1, 1]} : vector<2x96xf32> to vector<2x32xf32>
    %126 = vector.extract_strided_slice %106 {offsets = [0, 64], sizes = [2, 32], strides = [1, 1]} : vector<2x96xf32> to vector<2x32xf32>
    %127 = arith.mulf %116, %126 : vector<2x32xf32>
    %128 = arith.addf %125, %127 : vector<2x32xf32>
    %129 = math.tanh %128 : vector<2x32xf32>
    %cst_39 = arith.constant 1.000000e+00 : f32
    %130 = vector.broadcast %cst_39 : f32 to vector<2x32xf32>
    %131 = arith.subf %130, %124 : vector<2x32xf32>
    %132 = arith.mulf %131, %129 : vector<2x32xf32>
    %133 = arith.mulf %124, %103 : vector<2x32xf32>
    %134 = arith.addf %132, %133 : vector<2x32xf32>
    %cst_40 = arith.constant dense<0.000000e+00> : vector<2x96xf32>
    %135 = tpu.matmul %134, %39, %cst_40 {dimension_numbers = #tpu.dot_dimension_numbers<[1], [0], [0], [1], [0, 0, 1, 1], [], []>} : vector<2x32xf32>, vector<32x96xf32>, vector<2x96xf32> -> vector<2x96xf32>
    %136 = vector.broadcast %40 : vector<1x96xf32> to vector<2x96xf32>
    %137 = arith.addf %135, %136 : vector<2x96xf32>
    %138 = vector.extract_strided_slice %38 {offsets = [3, 0, 0], sizes = [1, 2, 96], strides = [1, 1, 1]} : vector<4x2x96xf32> to vector<1x2x96xf32>
    %139 = vector.shape_cast %138 : vector<1x2x96xf32> to vector<2x96xf32>
    %140 = vector.extract_strided_slice %139 {offsets = [0, 0], sizes = [2, 32], strides = [1, 1]} : vector<2x96xf32> to vector<2x32xf32>
    %141 = vector.extract_strided_slice %137 {offsets = [0, 0], sizes = [2, 32], strides = [1, 1]} : vector<2x96xf32> to vector<2x32xf32>
    %142 = arith.addf %140, %141 : vector<2x32xf32>
    %143 = arith.negf %142 : vector<2x32xf32>
    %144 = math.exp %143 : vector<2x32xf32>
    %cst_41 = arith.constant 1.000000e+00 : f32
    %145 = vector.broadcast %cst_41 : f32 to vector<2x32xf32>
    %146 = arith.addf %145, %144 : vector<2x32xf32>
    %147 = arith.divf %145, %146 : vector<2x32xf32>
    %148 = vector.extract_strided_slice %139 {offsets = [0, 32], sizes = [2, 32], strides = [1, 1]} : vector<2x96xf32> to vector<2x32xf32>
    %149 = vector.extract_strided_slice %137 {offsets = [0, 32], sizes = [2, 32], strides = [1, 1]} : vector<2x96xf32> to vector<2x32xf32>
    %150 = arith.addf %148, %149 : vector<2x32xf32>
    %151 = arith.negf %150 : vector<2x32xf32>
    %152 = math.exp %151 : vector<2x32xf32>
    %cst_42 = arith.constant 1.000000e+00 : f32
    %153 = vector.broadcast %cst_42 : f32 to vector<2x32xf32>
    %154 = arith.addf %153, %152 : vector<2x32xf32>
    %155 = arith.divf %153, %154 : vector<2x32xf32>
    %156 = vector.extract_strided_slice %139 {offsets = [0, 64], sizes = [2, 32], strides = [1, 1]} : vector<2x96xf32> to vector<2x32xf32>
    %157 = vector.extract_strided_slice %137 {offsets = [0, 64], sizes = [2, 32], strides = [1, 1]} : vector<2x96xf32> to vector<2x32xf32>
    %158 = arith.mulf %147, %157 : vector<2x32xf32>
    %159 = arith.addf %156, %158 : vector<2x32xf32>
    %160 = math.tanh %159 : vector<2x32xf32>
    %cst_43 = arith.constant 1.000000e+00 : f32
    %161 = vector.broadcast %cst_43 : f32 to vector<2x32xf32>
    %162 = arith.subf %161, %155 : vector<2x32xf32>
    %163 = arith.mulf %162, %160 : vector<2x32xf32>
    %164 = arith.mulf %155, %134 : vector<2x32xf32>
    %165 = arith.addf %163, %164 : vector<2x32xf32>
    %c0_44 = arith.constant 0 : index
    %c0_45 = arith.constant 0 : index
    %166 = vector.load %arg15[%c0_44, %c0_45] : memref<2x32xf32, #tpu.memory_space<vmem>>, vector<2x32xf32>
    tpu.vector_store %arg15[%c0_44, %c0_45], %165 {strides = array<i32>} : memref<2x32xf32, #tpu.memory_space<vmem>>, vector<2x32xf32>,
    %167 = vector.shape_cast %72 : vector<2x32xf32> to vector<1x2x32xf32>
    %168 = vector.shape_cast %103 : vector<2x32xf32> to vector<1x2x32xf32>
    %169 = vector.shape_cast %134 : vector<2x32xf32> to vector<1x2x32xf32>
    %170 = vector.shape_cast %165 : vector<2x32xf32> to vector<1x2x32xf32>
    %171 = tpu.concatenate %167, %168, %169, %170 in 0 : vector<1x2x32xf32>, vector<1x2x32xf32>, vector<1x2x32xf32>, vector<1x2x32xf32> -> vector<4x2x32xf32>
    %172 = tpu.transpose %171, [1, 0, 2] : vector<4x2x32xf32> -> vector<2x4x32xf32>
    %173 = vector.shape_cast %172 : vector<2x4x32xf32> to vector<8x32xf32>
    %c0_46 = arith.constant 0 : index
    %c0_47 = arith.constant 0 : index
    %174 = vector.load %arg12[%c0_46, %c0_47] : memref<32x4xf32, #tpu.memory_space<vmem>>, vector<32x4xf32>
    %cst_48 = arith.constant dense<0.000000e+00> : vector<8x4xf32>
    %175 = tpu.matmul %173, %174, %cst_48 {dimension_numbers = #tpu.dot_dimension_numbers<[1], [0], [0], [1], [0, 0, 1, 1], [], []>} : vector<8x32xf32>, vector<32x4xf32>, vector<8x4xf32> -> vector<8x4xf32>
    %c0_49 = arith.constant 0 : index
    %c0_50 = arith.constant 0 : index
    %176 = vector.load %arg13[%c0_49, %c0_50] : memref<1x4xf32, #tpu.memory_space<vmem>>, vector<1x4xf32>
    %177 = vector.broadcast %176 : vector<1x4xf32> to vector<8x4xf32>
    %178 = arith.addf %175, %177 : vector<8x4xf32>
    %c0_51 = arith.constant 0 : index
    %c0_52 = arith.constant 0 : index
    %179 = vector.load %arg14[%c0_51, %c0_52] : memref<8x4xf32, #tpu.memory_space<vmem>>, vector<8x4xf32>
    tpu.vector_store %arg14[%c0_51, %c0_52], %178 {strides = array<i32>} : memref<8x4xf32, #tpu.memory_space<vmem>>, vector<8x4xf32>,
    return
  }
  func.func @transform_0(%arg0: i32) -> (i32, i32) {
    %c0_i32 = arith.constant 0 : i32
    %c0_i32_0 = arith.constant 0 : i32
    return %arg0, %c0_i32 : i32, i32
  }
  func.func @transform_1(%arg0: i32) -> (i32, i32) {
    %c0_i32 = arith.constant 0 : i32
    %c0_i32_0 = arith.constant 0 : i32
    return %arg0, %c0_i32 : i32, i32
  }
  func.func @transform_2(%arg0: i32) -> (i32, i32) {
    %c0_i32 = arith.constant 0 : i32
    %c0_i32_0 = arith.constant 0 : i32
    return %arg0, %c0_i32 : i32, i32
  }
  func.func @transform_3(%arg0: i32) -> (i32, i32) {
    %c0_i32 = arith.constant 0 : i32
    %c0_i32_0 = arith.constant 0 : i32
    %c0_i32_1 = arith.constant 0 : i32
    return %c0_i32, %c0_i32_0 : i32, i32
  }
  func.func @transform_4(%arg0: i32) -> (i32, i32) {
    %c0_i32 = arith.constant 0 : i32
    %c0_i32_0 = arith.constant 0 : i32
    %c0_i32_1 = arith.constant 0 : i32
    return %c0_i32, %c0_i32_0 : i32, i32
  }
  func.func @transform_5(%arg0: i32) -> (i32, i32) {
    %c0_i32 = arith.constant 0 : i32
    %c0_i32_0 = arith.constant 0 : i32
    %c0_i32_1 = arith.constant 0 : i32
    return %c0_i32, %c0_i32_0 : i32, i32
  }
  func.func @transform_6(%arg0: i32) -> (i32, i32) {
    %c0_i32 = arith.constant 0 : i32
    %c0_i32_0 = arith.constant 0 : i32
    %c0_i32_1 = arith.constant 0 : i32
    return %c0_i32, %c0_i32_0 : i32, i32
  }
  func.func @transform_7(%arg0: i32) -> (i32, i32) {
    %c0_i32 = arith.constant 0 : i32
    %c0_i32_0 = arith.constant 0 : i32
    %c0_i32_1 = arith.constant 0 : i32
    return %c0_i32, %c0_i32_0 : i32, i32
  }
  func.func @transform_8(%arg0: i32) -> (i32, i32) {
    %c0_i32 = arith.constant 0 : i32
    %c0_i32_0 = arith.constant 0 : i32
    %c0_i32_1 = arith.constant 0 : i32
    return %c0_i32, %c0_i32_0 : i32, i32
  }
  func.func @transform_9(%arg0: i32) -> (i32, i32) {
    %c0_i32 = arith.constant 0 : i32
    %c0_i32_0 = arith.constant 0 : i32
    %c0_i32_1 = arith.constant 0 : i32
    return %c0_i32, %c0_i32_0 : i32, i32
  }
  func.func @transform_10(%arg0: i32) -> (i32, i32) {
    %c0_i32 = arith.constant 0 : i32
    %c0_i32_0 = arith.constant 0 : i32
    %c0_i32_1 = arith.constant 0 : i32
    return %c0_i32, %c0_i32_0 : i32, i32
  }
  func.func @transform_11(%arg0: i32) -> (i32, i32) {
    %c0_i32 = arith.constant 0 : i32
    %c0_i32_0 = arith.constant 0 : i32
    %c0_i32_1 = arith.constant 0 : i32
    return %c0_i32, %c0_i32_0 : i32, i32
  }
  func.func @transform_12(%arg0: i32) -> (i32, i32) {
    %c0_i32 = arith.constant 0 : i32
    %c0_i32_0 = arith.constant 0 : i32
    %c0_i32_1 = arith.constant 0 : i32
    return %c0_i32, %c0_i32_0 : i32, i32
  }
  func.func @transform_13(%arg0: i32) -> (i32, i32) {
    %c0_i32 = arith.constant 0 : i32
    %c0_i32_0 = arith.constant 0 : i32
    return %arg0, %c0_i32 : i32, i32
  }
  func.func @transform_14(%arg0: i32) -> (i32, i32) {
    %c0_i32 = arith.constant 0 : i32
    %c0_i32_0 = arith.constant 0 : i32
    return %arg0, %c0_i32 : i32, i32
  }
}

</mosaic_0001>

<llo_original>
// kernel: mental_forward.1
$region0: #{mental_forward.1}
  #allocation0 [shape = 'u32[]', space=smem, size = 0x4, offset = 0x4, fixed_abs, tag = 'smem constant byte address 0x4 - core index']
  #allocation1 [shape = 'u32[144,128]{1,0:T(1,128)}', space=vmem, size = 0x12000, scoped, tag = 'internal scratch']
  %s0 = inlined_call_operand.vmem [shape: f32[8,10], index: 0, kind: input, shape index: {}]
  %s1 = inlined_call_operand.vmem [shape: f32[16,60], index: 1, kind: input, shape index: {}]
  %s2 = inlined_call_operand.hbm [shape: f32[2,32], index: 2, kind: input, shape index: {}]
  %s3 = inlined_call_operand.hbm [shape: f32[10,60], index: 3, kind: input, shape index: {}]
  %s4 = inlined_call_operand.vmem [shape: f32[1,60], index: 4, kind: input, shape index: {}]
  %s5 = inlined_call_operand.vmem [shape: f32[60,120], index: 5, kind: input, shape index: {}]
  %s6 = inlined_call_operand.hbm [shape: f32[1,120], index: 6, kind: input, shape index: {}]
  %s7 = inlined_call_operand.hbm [shape: f32[60,96], index: 7, kind: input, shape index: {}]
  %s8 = inlined_call_operand.hbm [shape: f32[1,96], index: 8, kind: input, shape index: {}]
  %s9 = inlined_call_operand.hbm [shape: f32[32,96], index: 9, kind: input, shape index: {}]
  %s10 = inlined_call_operand.hbm [shape: f32[1,96], index: 10, kind: input, shape index: {}]
  %s11 = inlined_call_operand.vmem [shape: f32[32,4], index: 11, kind: input, shape index: {}]
  %s12 = inlined_call_operand.hbm [shape: f32[1,4], index: 12, kind: input, shape index: {}]
  %s13 = inlined_call_operand.hbm [shape: f32[8,4], index: 13, kind: output, shape index: {0}]
  %s14 = inlined_call_operand.hbm [shape: f32[2,32], index: 14, kind: output, shape index: {1}]
  %15 = xla_tuple %s13, %s14
  %s16 = sld [smem:[#allocation0]]
  $region102: #{mental_forward.1} parent=0
    _
  %s18 = ssub.s32 1, %s16
  %s19 = scalar_select 0, %s18, %s16
  $region1: #{mental_forward.1} parent=0
    #allocation2 [shape = 'u8[1024]{0}', space=vmem, size = 0x400, scoped, tag = 'input window, operand 2, single buffered']
    #allocation3 [shape = 's32[1]{0}', space=sflag, size = 0x4, scoped, tag = 'scoped memory for mental_forward.1']
    #allocation4 [shape = 's32[1]{0}', space=sflag, size = 0x4, scoped, tag = 'scoped memory for mental_forward.1']
    #allocation5 [shape = 'u8[8192]{0}', space=vmem, size = 0x2000, scoped, tag = 'input window, operand 3, single buffered']
    #allocation6 [shape = 's32[1]{0}', space=sflag, size = 0x4, scoped, tag = 'scoped memory for mental_forward.1']
    #allocation7 [shape = 'u8[512]{0}', space=vmem, size = 0x400, scoped, tag = 'input window, operand 6, single buffered']
    #allocation8 [shape = 'u8[32768]{0}', space=vmem, size = 0x8000, scoped, tag = 'input window, operand 7, single buffered']
    #allocation9 [shape = 's32[1]{0}', space=sflag, size = 0x4, scoped, tag = 'scoped memory for mental_forward.1']
    #allocation10 [shape = 'u8[512]{0}', space=vmem, size = 0x400, scoped, tag = 'input window, operand 8, single buffered']
    #allocation11 [shape = 'u8[16384]{0}', space=vmem, size = 0x4000, scoped, tag = 'input window, operand 9, single buffered']
    #allocation12 [shape = 's32[1]{0}', space=sflag, size = 0x4, scoped, tag = 'scoped memory for mental_forward.1']
    #allocation13 [shape = 'u8[512]{0}', space=vmem, size = 0x400, scoped, tag = 'input window, operand 10, single buffered']
    #allocation14 [shape = 'u8[512]{0}', space=vmem, size = 0x400, scoped, tag = 'input window, operand 12, single buffered']
    #allocation15 [shape = 's32[1]{0}', space=sflag, size = 0x4, scoped, tag = 'scoped memory for mental_forward.1']
    #allocation16 [shape = 'u8[4096]{0}', space=vmem, size = 0x1000, scoped, tag = 'output window, operand 0, single buffered']
    #allocation17 [shape = 'u8[1024]{0}', space=vmem, size = 0x400, scoped, tag = 'output window, operand 1, single buffered']
    #allocation18 [shape = 's32[1]{0}', space=sflag, size = 0x4, scoped, tag = 'scoped memory for mental_forward.1']
    %20 = vsyncpa [#allocation3], 0
    %21 = vsyncpa [#allocation6], 0
    %22 = vsyncpa [#allocation9], 0
    %23 = vsyncpa [#allocation12], 0
    %24 = vsyncpa [#allocation15], 0
    %25 = vsyncpa [#allocation4], 0
    %26 = vsyncpa [#allocation18], 0
    // Predicated region
    $region2: #{mental_forward.1} parent=1 // pred_check
      _
    $region3: #{mental_forward.1} parent=1 // pred_check_branch
      %28 = sbr.rel (0) target = $region5
    $region4: #{mental_forward.1} parent=1 // pred_region
      _
    $region5: #{mental_forward.1} parent=1 // pred_fallthru
      _
    // Predicated region
    $region6: #{mental_forward.1} parent=1 // pred_check
      _
    $region7: #{mental_forward.1} parent=1 // pred_check_branch
      %30 = sbr.rel (0) target = $region9
    $region8: #{mental_forward.1} parent=1 // pred_region
      _
    $region9: #{mental_forward.1} parent=1 // pred_fallthru
      _
    // Predicated region
    $region10: #{mental_forward.1} parent=1 // pred_check
      _
    $region11: #{mental_forward.1} parent=1 // pred_check_branch
      %32 = sbr.rel (0) target = $region13
    $region12: #{mental_forward.1} parent=1 // pred_region
      %s34 = ssub.s32 32, 32
      %35 = vsyncadd [#allocation3], %s34
      %s37 = sshll.u32 [#allocation2], 4
      %s38 = int_to_ptr.vmem [resolvable:$true] %s37
      %40 = dma.hbm_to_vmem [thread:$0]  %s2, 32, %s38, [#allocation3]
    $region13: #{mental_forward.1} parent=1 // pred_fallthru
      _
    // Predicated region
    $region14: #{mental_forward.1} parent=1 // pred_check
      _
    $region15: #{mental_forward.1} parent=1 // pred_check_branch
      %42 = sbr.rel (0) target = $region17
    $region16: #{mental_forward.1} parent=1 // pred_region
      %s44 = ssub.s32 256, 256
      %45 = vsyncadd [#allocation6], %s44
      %s46 = sshll.u32 [#allocation5], 4
      %s47 = int_to_ptr.vmem [resolvable:$true] %s46
      %52 = dma.hbm_to_vmem [thread:$0]  %s3, 256, %s47, [#allocation6], 128, 128, 8
    $region17: #{mental_forward.1} parent=1 // pred_fallthru
      _
    // Predicated region
    $region18: #{mental_forward.1} parent=1 // pred_check
      _
    $region19: #{mental_forward.1} parent=1 // pred_check_branch
      %54 = sbr.rel (0) target = $region21
    $region20: #{mental_forward.1} parent=1 // pred_region
      _
    $region21: #{mental_forward.1} parent=1 // pred_fallthru
      _
    // Predicated region
    $region22: #{mental_forward.1} parent=1 // pred_check
      _
    $region23: #{mental_forward.1} parent=1 // pred_check_branch
      %56 = sbr.rel (0) target = $region25
    $region24: #{mental_forward.1} parent=1 // pred_region
      _
    $region25: #{mental_forward.1} parent=1 // pred_fallthru
      _
    // Predicated region
    $region26: #{mental_forward.1} parent=1 // pred_check
      _
    $region27: #{mental_forward.1} parent=1 // pred_check_branch
      %58 = sbr.rel (0) target = $region29
    $region28: #{mental_forward.1} parent=1 // pred_region
      %s60 = ssub.s32 16, 16
      %61 = vsyncadd [#allocation6], %s60
      %s63 = sshll.u32 [#allocation7], 4
      %s64 = int_to_ptr.vmem [resolvable:$true] %s63
      %66 = dma.hbm_to_vmem [thread:$0]  %s6, 16, %s64, [#allocation6]
    $region29: #{mental_forward.1} parent=1 // pred_fallthru
      _
    // Predicated region
    $region30: #{mental_forward.1} parent=1 // pred_check
      _
    $region31: #{mental_forward.1} parent=1 // pred_check_branch
      %68 = sbr.rel (0) target = $region33
    $region32: #{mental_forward.1} parent=1 // pred_region
      %s70 = ssub.s32 1024, 1024
      %71 = vsyncadd [#allocation9], %s70
      %s72 = sshll.u32 [#allocation8], 4
      %s73 = int_to_ptr.vmem [resolvable:$true] %s72
      %78 = dma.hbm_to_vmem [thread:$0]  %s7, 1024, %s73, [#allocation9], 128, 128, 8
    $region33: #{mental_forward.1} parent=1 // pred_fallthru
      _
    // Predicated region
    $region34: #{mental_forward.1} parent=1 // pred_check
      _
    $region35: #{mental_forward.1} parent=1 // pred_check_branch
      %80 = sbr.rel (0) target = $region37
    $region36: #{mental_forward.1} parent=1 // pred_region
      %s82 = ssub.s32 16, 16
      %83 = vsyncadd [#allocation9], %s82
      %s85 = sshll.u32 [#allocation10], 4
      %s86 = int_to_ptr.vmem [resolvable:$true] %s85
      %88 = dma.hbm_to_vmem [thread:$0]  %s8, 16, %s86, [#allocation9]
    $region37: #{mental_forward.1} parent=1 // pred_fallthru
      _
    // Predicated region
    $region38: #{mental_forward.1} parent=1 // pred_check
      _
    $region39: #{mental_forward.1} parent=1 // pred_check_branch
      %90 = sbr.rel (0) target = $region41
    $region40: #{mental_forward.1} parent=1 // pred_region
      %s92 = ssub.s32 512, 512
      %93 = vsyncadd [#allocation12], %s92
      %s94 = sshll.u32 [#allocation11], 4
      %s95 = int_to_ptr.vmem [resolvable:$true] %s94
      %100 = dma.hbm_to_vmem [thread:$0]  %s9, 512, %s95, [#allocation12], 128, 128, 8
    $region41: #{mental_forward.1} parent=1 // pred_fallthru
      _
    // Predicated region
    $region42: #{mental_forward.1} parent=1 // pred_check
      _
    $region43: #{mental_forward.1} parent=1 // pred_check_branch
      %102 = sbr.rel (0) target = $region45
    $region44: #{mental_forward.1} parent=1 // pred_region
      %s104 = ssub.s32 16, 16
      %105 = vsyncadd [#allocation12], %s104
      %s107 = sshll.u32 [#allocation13], 4
      %s108 = int_to_ptr.vmem [resolvable:$true] %s107
      %110 = dma.hbm_to_vmem [thread:$0]  %s10, 16, %s108, [#allocation12]
    $region45: #{mental_forward.1} parent=1 // pred_fallthru
      _
    // Predicated region
    $region46: #{mental_forward.1} parent=1 // pred_check
      _
    $region47: #{mental_forward.1} parent=1 // pred_check_branch
      %112 = sbr.rel (0) target = $region49
    $region48: #{mental_forward.1} parent=1 // pred_region
      _
    $region49: #{mental_forward.1} parent=1 // pred_fallthru
      _
    // Predicated region
    $region50: #{mental_forward.1} parent=1 // pred_check
      _
    $region51: #{mental_forward.1} parent=1 // pred_check_branch
      %114 = sbr.rel (0) target = $region53
    $region52: #{mental_forward.1} parent=1 // pred_region
      %s116 = ssub.s32 16, 16
      %117 = vsyncadd [#allocation15], %s116
      %s119 = sshll.u32 [#allocation14], 4
      %s120 = int_to_ptr.vmem [resolvable:$true] %s119
      %122 = dma.hbm_to_vmem [thread:$0]  %s12, 16, %s120, [#allocation15]
    $region53: #{mental_forward.1} parent=1 // pred_fallthru
      _
    // Predicated region
    $region54: #{mental_forward.1} parent=1 // pred_check
      _
    $region55: #{mental_forward.1} parent=1 // pred_check_branch
      %124 = sbr.rel (0) target = $region57
    $region56: #{mental_forward.1} parent=1 // pred_region
      %125 = dma.done [#allocation3], 32
    $region57: #{mental_forward.1} parent=1 // pred_fallthru
      _
    // Predicated region
    $region58: #{mental_forward.1} parent=1 // pred_check
      _
    $region59: #{mental_forward.1} parent=1 // pred_check_branch
      %127 = sbr.rel (0) target = $region61
    $region60: #{mental_forward.1} parent=1 // pred_region
      %128 = dma.done [#allocation6], 256
    $region61: #{mental_forward.1} parent=1 // pred_fallthru
      _
    // Predicated region
    $region62: #{mental_forward.1} parent=1 // pred_check
      _
    $region63: #{mental_forward.1} parent=1 // pred_check_branch
      %130 = sbr.rel (0) target = $region65
    $region64: #{mental_forward.1} parent=1 // pred_region
      %131 = dma.done [#allocation6], 16
    $region65: #{mental_forward.1} parent=1 // pred_fallthru
      _
    // Predicated region
    $region66: #{mental_forward.1} parent=1 // pred_check
      _
    $region67: #{mental_forward.1} parent=1 // pred_check_branch
      %133 = sbr.rel (0) target = $region69
    $region68: #{mental_forward.1} parent=1 // pred_region
      %134 = dma.done [#allocation9], 1024
    $region69: #{mental_forward.1} parent=1 // pred_fallthru
      _
    // Predicated region
    $region70: #{mental_forward.1} parent=1 // pred_check
      _
    $region71: #{mental_forward.1} parent=1 // pred_check_branch
      %136 = sbr.rel (0) target = $region73
    $region72: #{mental_forward.1} parent=1 // pred_region
      %137 = dma.done [#allocation9], 16
    $region73: #{mental_forward.1} parent=1 // pred_fallthru
      _
    // Predicated region
    $region74: #{mental_forward.1} parent=1 // pred_check
      _
    $region75: #{mental_forward.1} parent=1 // pred_check_branch
      %139 = sbr.rel (0) target = $region77
    $region76: #{mental_forward.1} parent=1 // pred_region
      %140 = dma.done [#allocation12], 512
    $region77: #{mental_forward.1} parent=1 // pred_fallthru
      _
    // Predicated region
    $region78: #{mental_forward.1} parent=1 // pred_check
      _
    $region79: #{mental_forward.1} parent=1 // pred_check_branch
      %142 = sbr.rel (0) target = $region81
    $region80: #{mental_forward.1} parent=1 // pred_region
      %143 = dma.done [#allocation12], 16
    $region81: #{mental_forward.1} parent=1 // pred_fallthru
      _
    // Predicated region
    $region82: #{mental_forward.1} parent=1 // pred_check
      _
    $region83: #{mental_forward.1} parent=1 // pred_check_branch
      %145 = sbr.rel (0) target = $region85
    $region84: #{mental_forward.1} parent=1 // pred_region
      %146 = dma.done [#allocation15], 16
    $region85: #{mental_forward.1} parent=1 // pred_fallthru
      _
    %v147 = vld [vmem:[%s0] sm:$0xff]
    %v148 = vld [vmem:[#allocation5] sm:$0xff]
    %v149 = vld [vmem:[#allocation5 + $0x8] sm:$0x3]
    %v150 = vld [vmem:[%s4] sm:$0x1]
    %v152 = vlaneseq
    %v153 = vshrl.u32 %v152, 7
    %v154 = vsub.s32 0, %v153
    %v155 = vrot.slane %v150, %v154
    %vm157 = vcmask 80896
    %v159 = vsel %vm157, %v147, 0
    %vm161 = vcmask 1041408
    %v163 = vsel %vm161, %v149, 0
    %165 = vmatprep.subr.mxu0 0.0
    %166 = vmatpush1.msra.mxu0 %v148
    %167 = vmatprep.subr.mxu0 0.0
    %168 = vmatpush1.msra.mxu0 %v163
    %169 = vmatprep.subr.mxu0 0.0
    %170 = vmatpush1.msra.mxu0 0.0
    %171 = vmatprep.subr.mxu0 0.0
    %172 = vmatpush1.msra.mxu0 0.0
    %173 = vmatprep.subr.mxu0 0.0
    %174 = vmatpush1.msra.mxu0 0.0
    %175 = vmatprep.subr.mxu0 0.0
    %176 = vmatpush1.msra.mxu0 0.0
    %177 = vmatprep.subr.mxu0 0.0
    %178 = vmatpush1.msra.mxu0 0.0
    %179 = vmatprep.subr.mxu0 0.0
    %180 = vmatpush1.msra.mxu0 0.0
    %181 = vmatprep.subr.mxu0 0.0
    %182 = vmatpush1.msra.mxu0 0.0
    %183 = vmatprep.subr.mxu0 0.0
    %184 = vmatpush1.msra.mxu0 0.0
    %185 = vmatprep.subr.mxu0 0.0
    %186 = vmatpush1.msra.mxu0 0.0
    %187 = vmatprep.subr.mxu0 0.0
    %188 = vmatpush1.msra.mxu0 0.0
    %189 = vmatprep.subr.mxu0 0.0
    %190 = vmatpush1.msra.mxu0 0.0
    %191 = vmatprep.subr.mxu0 0.0
    %192 = vmatpush1.msra.mxu0 0.0
    %193 = vmatprep.subr.mxu0 0.0
    %194 = vmatpush1.msra.mxu0 0.0
    %195 = vmatprep.subr.mxu0 0.0
    %196 = vmatpush1.msra.mxu0 0.0
    %197 = vmatprep.subr.mxu0 0.0
    %198 = vmatpush1.msra.mxu0 0.0
    %199 = vmatprep.subr.mxu0 0.0
    %200 = vmatpush1.msra.mxu0 0.0
    %201 = vmatprep.subr.mxu0 0.0
    %202 = vmatpush1.msra.mxu0 0.0
    %203 = vmatprep.subr.mxu0 0.0
    %204 = vmatpush1.msra.mxu0 0.0
    %205 = vmatprep.subr.mxu0 0.0
    %206 = vmatpush1.msra.mxu0 0.0
    %207 = vmatprep.subr.mxu0 0.0
    %208 = vmatpush1.msra.mxu0 0.0
    %209 = vmatprep.subr.mxu0 0.0
    %210 = vmatpush1.msra.mxu0 0.0
    %211 = vmatprep.subr.mxu0 0.0
    %212 = vmatpush1.msra.mxu0 0.0
    %213 = vmatprep.subr.mxu0 0.0
    %214 = vmatpush1.msra.mxu0 0.0
    %215 = vmatprep.subr.mxu0 0.0
    %216 = vmatpush1.msra.mxu0 0.0
    %217 = vmatprep.subr.mxu0 0.0
    %218 = vmatpush1.msra.mxu0 0.0
    %219 = vmatprep.subr.mxu0 0.0
    %220 = vmatpush1.msra.mxu0 0.0
    %221 = vmatprep.subr.mxu0 0.0
    %222 = vmatpush1.msra.mxu0 0.0
    %223 = vmatprep.subr.mxu0 0.0
    %224 = vmatpush1.msra.mxu0 0.0
    %225 = vmatprep.subr.mxu0 0.0
    %226 = vmatpush1.msra.mxu0 0.0
    %227 = vmatprep.subr.mxu0 0.0
    %228 = vmatpush1.msra.mxu0 0.0
    %229 = vmatprep.mubr.f32.mxu0 0.0
    %230 = vmatmul.mubr.f32.gmra.mrb[0].mxu0 %v159
    %v231 = vpop.f32.mrb[0].mxu0
    %v232 = vadd.f32 %v155, %v231
    %v233 = vpop.f32.mrb[0].mxu0
    %234 = vdwg.mxu0
    %v235 = vld [vmem:[%s1] sm:$0xff]
    %v236 = vld [vmem:[%s1 + $0x8] sm:$0xff]
    %v237 = vld [vmem:[%s5] sm:$0xff]
    %v238 = vld [vmem:[%s5 + $0x8] sm:$0xff]
    %v239 = vld [vmem:[%s5 + $0x10] sm:$0xff]
    %v240 = vld [vmem:[%s5 + $0x18] sm:$0xff]
    %v241 = vld [vmem:[%s5 + $0x20] sm:$0xff]
    %v242 = vld [vmem:[%s5 + $0x28] sm:$0xff]
    %v243 = vld [vmem:[%s5 + $0x30] sm:$0xff]
    %v244 = vld [vmem:[%s5 + $0x38] sm:$0xf]
    %v245 = vld [vmem:[#allocation7] sm:$0x1]
    %v247 = vlaneseq
    %v248 = vshrl.u32 %v247, 7
    %v249 = vsub.s32 0, %v248
    %v250 = vrot.slane %v245, %v249
    %vm252 = vcmask 490496
    %v254 = vsel %vm252, %v235, 0
    %v257 = vsel %vm252, %v236, 0
    %vm259 = vcmask 1043456
    %v261 = vsel %vm259, %v244, 0
    %263 = vmatprep.subr.mxu0 0.0
    %264 = vmatpush1.msra.mxu0 %v237
    %265 = vmatprep.subr.mxu0 0.0
    %266 = vmatpush1.msra.mxu0 %v238
    %267 = vmatprep.subr.mxu0 0.0
    %268 = vmatpush1.msra.mxu0 %v239
    %269 = vmatprep.subr.mxu0 0.0
    %270 = vmatpush1.msra.mxu0 %v240
    %271 = vmatprep.subr.mxu0 0.0
    %272 = vmatpush1.msra.mxu0 %v241
    %273 = vmatprep.subr.mxu0 0.0
    %274 = vmatpush1.msra.mxu0 %v242
    %275 = vmatprep.subr.mxu0 0.0
    %276 = vmatpush1.msra.mxu0 %v243
    %277 = vmatprep.subr.mxu0 0.0
    %278 = vmatpush1.msra.mxu0 %v261
    %279 = vmatprep.subr.mxu0 0.0
    %280 = vmatpush1.msra.mxu0 0.0
    %281 = vmatprep.subr.mxu0 0.0
    %282 = vmatpush1.msra.mxu0 0.0
    %283 = vmatprep.subr.mxu0 0.0
    %284 = vmatpush1.msra.mxu0 0.0
    %285 = vmatprep.subr.mxu0 0.0
    %286 = vmatpush1.msra.mxu0 0.0
    %287 = vmatprep.subr.mxu0 0.0
    %288 = vmatpush1.msra.mxu0 0.0
    %289 = vmatprep.subr.mxu0 0.0
    %290 = vmatpush1.msra.mxu0 0.0
    %291 = vmatprep.subr.mxu0 0.0
    %292 = vmatpush1.msra.mxu0 0.0
    %293 = vmatprep.subr.mxu0 0.0
    %294 = vmatpush1.msra.mxu0 0.0
    %295 = vmatprep.subr.mxu0 0.0
    %296 = vmatpush1.msra.mxu0 0.0
    %297 = vmatprep.subr.mxu0 0.0
    %298 = vmatpush1.msra.mxu0 0.0
    %299 = vmatprep.subr.mxu0 0.0
    %300 = vmatpush1.msra.mxu0 0.0
    %301 = vmatprep.subr.mxu0 0.0
    %302 = vmatpush1.msra.mxu0 0.0
    %303 = vmatprep.subr.mxu0 0.0
    %304 = vmatpush1.msra.mxu0 0.0
    %305 = vmatprep.subr.mxu0 0.0
    %306 = vmatpush1.msra.mxu0 0.0
    %307 = vmatprep.subr.mxu0 0.0
    %308 = vmatpush1.msra.mxu0 0.0
    %309 = vmatprep.subr.mxu0 0.0
    %310 = vmatpush1.msra.mxu0 0.0
    %311 = vmatprep.subr.mxu0 0.0
    %312 = vmatpush1.msra.mxu0 0.0
    %313 = vmatprep.subr.mxu0 0.0
    %314 = vmatpush1.msra.mxu0 0.0
    %315 = vmatprep.subr.mxu0 0.0
    %316 = vmatpush1.msra.mxu0 0.0
    %317 = vmatprep.subr.mxu0 0.0
    %318 = vmatpush1.msra.mxu0 0.0
    %319 = vmatprep.subr.mxu0 0.0
    %320 = vmatpush1.msra.mxu0 0.0
    %321 = vmatprep.subr.mxu0 0.0
    %322 = vmatpush1.msra.mxu0 0.0
    %323 = vmatprep.subr.mxu0 0.0
    %324 = vmatpush1.msra.mxu0 0.0
    %325 = vmatprep.subr.mxu0 0.0
    %326 = vmatpush1.msra.mxu0 0.0
    %327 = vmatprep.mubr.f32.mxu0 0.0
    %328 = vmatmul.mubr.f32.gmra.mrb[0].mxu0 %v254
    %v329 = vpop.f32.mrb[0].mxu0
    %v330 = vadd.f32 %v250, %v329
    %v331 = vpop.f32.mrb[0].mxu0
    %332 = vmatprep.mubr.f32.mxu0 0.0
    %333 = vmatmul.mubr.f32.gmra.mrb[0].mxu0 %v257
    %v334 = vpop.f32.mrb[0].mxu0
    %v335 = vadd.f32 %v250, %v334
    %v336 = vpop.f32.mrb[0].mxu0
    %337 = vdwg.mxu0
    %v339 = vcombine.high %v232, %v232
    %v340 = vsel %vm252, %v232, 0
    %v343 = vsel %vm252, %v330, 0
    %345 = vmatprep.subr.mxu0 0.0
    %346 = vmatpush1.xpose.msra.mxu0 %v343
    %347 = vmatprep.subr.mxu0 0.0
    %348 = vmatpush1.xpose.msra.mxu0 0.0
    %349 = vmatprep.subr.mxu0 0.0
    %350 = vmatpush1.xpose.msra.mxu0 0.0
    %351 = vmatprep.subr.mxu0 0.0
    %352 = vmatpush1.xpose.msra.mxu0 0.0
    %353 = vmatprep.subr.mxu0 0.0
    %354 = vmatpush1.xpose.msra.mxu0 0.0
    %355 = vmatprep.subr.mxu0 0.0
    %356 = vmatpush1.xpose.msra.mxu0 0.0
    %357 = vmatprep.subr.mxu0 0.0
    %358 = vmatpush1.xpose.msra.mxu0 0.0
    %359 = vmatprep.subr.mxu0 0.0
    %360 = vmatpush1.xpose.msra.mxu0 0.0
    %361 = vmatprep.subr.mxu0 0.0
    %362 = vmatpush1.xpose.msra.mxu0 0.0
    %363 = vmatprep.subr.mxu0 0.0
    %364 = vmatpush1.xpose.msra.mxu0 0.0
    %365 = vmatprep.subr.mxu0 0.0
    %366 = vmatpush1.xpose.msra.mxu0 0.0
    %367 = vmatprep.subr.mxu0 0.0
    %368 = vmatpush1.xpose.msra.mxu0 0.0
    %369 = vmatprep.subr.mxu0 0.0
    %370 = vmatpush1.xpose.msra.mxu0 0.0
    %371 = vmatprep.subr.mxu0 0.0
    %372 = vmatpush1.xpose.msra.mxu0 0.0
    %373 = vmatprep.subr.mxu0 0.0
    %374 = vmatpush1.xpose.msra.mxu0 0.0
    %375 = vmatprep.subr.mxu0 0.0
    %376 = vmatpush1.xpose.msra.mxu0 0.0
    %377 = vmatprep.subr.mxu0 0.0
    %378 = vmatpush1.xpose.msra.mxu0 0.0
    %379 = vmatprep.subr.mxu0 0.0
    %380 = vmatpush1.xpose.msra.mxu0 0.0
    %381 = vmatprep.subr.mxu0 0.0
    %382 = vmatpush1.xpose.msra.mxu0 0.0
    %383 = vmatprep.subr.mxu0 0.0
    %384 = vmatpush1.xpose.msra.mxu0 0.0
    %385 = vmatprep.subr.mxu0 0.0
    %386 = vmatpush1.xpose.msra.mxu0 0.0
    %387 = vmatprep.subr.mxu0 0.0
    %388 = vmatpush1.xpose.msra.mxu0 0.0
    %389 = vmatprep.subr.mxu0 0.0
    %390 = vmatpush1.xpose.msra.mxu0 0.0
    %391 = vmatprep.subr.mxu0 0.0
    %392 = vmatpush1.xpose.msra.mxu0 0.0
    %393 = vmatprep.subr.mxu0 0.0
    %394 = vmatpush1.xpose.msra.mxu0 0.0
    %395 = vmatprep.subr.mxu0 0.0
    %396 = vmatpush1.xpose.msra.mxu0 0.0
    %397 = vmatprep.subr.mxu0 0.0
    %398 = vmatpush1.xpose.msra.mxu0 0.0
    %399 = vmatprep.subr.mxu0 0.0
    %400 = vmatpush1.xpose.msra.mxu0 0.0
    %401 = vmatprep.subr.mxu0 0.0
    %402 = vmatpush1.xpose.msra.mxu0 0.0
    %403 = vmatprep.subr.mxu0 0.0
    %404 = vmatpush1.xpose.msra.mxu0 0.0
    %405 = vmatprep.subr.mxu0 0.0
    %406 = vmatpush1.xpose.msra.mxu0 0.0
    %407 = vmatprep.subr.mxu0 0.0
    %408 = vmatpush1.xpose.msra.mxu0 0.0
    %409 = vmatprep.mubr.f32.mxu0 0.0
    %410 = vmatmul.mubr.f32.gmra.mrb[0].mxu0 %v340
    %v411 = vpop.f32.mrb[0].mxu0
    %v412 = vadd.f32 0.0, %v411
    %v413 = vpop.f32.mrb[0].mxu0
    %414 = vdwg.mxu0
    %v415 = vsel %vm252, %v339, 0
    %v418 = vsel %vm252, %v335, 0
    %420 = vmatprep.subr.mxu0 0.0
    %421 = vmatpush1.xpose.msra.mxu0 %v418
    %422 = vmatprep.subr.mxu0 0.0
    %423 = vmatpush1.xpose.msra.mxu0 0.0
    %424 = vmatprep.subr.mxu0 0.0
    %425 = vmatpush1.xpose.msra.mxu0 0.0
    %426 = vmatprep.subr.mxu0 0.0
    %427 = vmatpush1.xpose.msra.mxu0 0.0
    %428 = vmatprep.subr.mxu0 0.0
    %429 = vmatpush1.xpose.msra.mxu0 0.0
    %430 = vmatprep.subr.mxu0 0.0
    %431 = vmatpush1.xpose.msra.mxu0 0.0
    %432 = vmatprep.subr.mxu0 0.0
    %433 = vmatpush1.xpose.msra.mxu0 0.0
    %434 = vmatprep.subr.mxu0 0.0
    %435 = vmatpush1.xpose.msra.mxu0 0.0
    %436 = vmatprep.subr.mxu0 0.0
    %437 = vmatpush1.xpose.msra.mxu0 0.0
    %438 = vmatprep.subr.mxu0 0.0
    %439 = vmatpush1.xpose.msra.mxu0 0.0
    %440 = vmatprep.subr.mxu0 0.0
    %441 = vmatpush1.xpose.msra.mxu0 0.0
    %442 = vmatprep.subr.mxu0 0.0
    %443 = vmatpush1.xpose.msra.mxu0 0.0
    %444 = vmatprep.subr.mxu0 0.0
    %445 = vmatpush1.xpose.msra.mxu0 0.0
    %446 = vmatprep.subr.mxu0 0.0
    %447 = vmatpush1.xpose.msra.mxu0 0.0
    %448 = vmatprep.subr.mxu0 0.0
    %449 = vmatpush1.xpose.msra.mxu0 0.0
    %450 = vmatprep.subr.mxu0 0.0
    %451 = vmatpush1.xpose.msra.mxu0 0.0
    %452 = vmatprep.subr.mxu0 0.0
    %453 = vmatpush1.xpose.msra.mxu0 0.0
    %454 = vmatprep.subr.mxu0 0.0
    %455 = vmatpush1.xpose.msra.mxu0 0.0
    %456 = vmatprep.subr.mxu0 0.0
    %457 = vmatpush1.xpose.msra.mxu0 0.0
    %458 = vmatprep.subr.mxu0 0.0
    %459 = vmatpush1.xpose.msra.mxu0 0.0
    %460 = vmatprep.subr.mxu0 0.0
    %461 = vmatpush1.xpose.msra.mxu0 0.0
    %462 = vmatprep.subr.mxu0 0.0
    %463 = vmatpush1.xpose.msra.mxu0 0.0
    %464 = vmatprep.subr.mxu0 0.0
    %465 = vmatpush1.xpose.msra.mxu0 0.0
    %466 = vmatprep.subr.mxu0 0.0
    %467 = vmatpush1.xpose.msra.mxu0 0.0
    %468 = vmatprep.subr.mxu0 0.0
    %469 = vmatpush1.xpose.msra.mxu0 0.0
    %470 = vmatprep.subr.mxu0 0.0
    %471 = vmatpush1.xpose.msra.mxu0 0.0
    %472 = vmatprep.subr.mxu0 0.0
    %473 = vmatpush1.xpose.msra.mxu0 0.0
    %474 = vmatprep.subr.mxu0 0.0
    %475 = vmatpush1.xpose.msra.mxu0 0.0
    %476 = vmatprep.subr.mxu0 0.0
    %477 = vmatpush1.xpose.msra.mxu0 0.0
    %478 = vmatprep.subr.mxu0 0.0
    %479 = vmatpush1.xpose.msra.mxu0 0.0
    %480 = vmatprep.subr.mxu0 0.0
    %481 = vmatpush1.xpose.msra.mxu0 0.0
    %482 = vmatprep.subr.mxu0 0.0
    %483 = vmatpush1.xpose.msra.mxu0 0.0
    %484 = vmatprep.mubr.f32.mxu0 0.0
    %485 = vmatmul.mubr.f32.gmra.mrb[0].mxu0 %v415
    %v486 = vpop.f32.mrb[0].mxu0
    %v487 = vadd.f32 0.0, %v486
    %v488 = vpop.f32.mrb[0].mxu0
    %489 = vdwg.mxu0
    %v490 = vmul.f32 %v412, 0.12909944
    %v491 = vmul.f32 %v487, 0.12909944
    %vm492 = vcmask 60416
    %v493 = vsel %vm492, %v490, -inf
    %494 = vmax.xlane.f32.xlu0 %v493
    %v495 = vpop.xlane.xlu0 %494
    %v496 = vsel %vm492, %v491, -inf
    %497 = vmax.xlane.f32.xlu0 %v496
    %v498 = vpop.xlane.xlu0 %497
    %v499 = vsub.f32 %v490, %v495
    %v500 = vsub.f32 %v491, %v498
    %v501 = vmul.f32 %v499, 1.442695
    %v502 = vpow.pop %v501
    %v503 = vmul.f32 %v500, 1.442695
    %v504 = vpow.pop %v503
    %v505 = vsel %vm492, %v502, 0.0
    %506 = vadd.xlane.f32.xlu0 %v505
    %v507 = vpop.xlane.xlu0 %506
    %v508 = vsel %vm492, %v504, 0.0
    %509 = vadd.xlane.f32.xlu0 %v508
    %v510 = vpop.xlane.xlu0 %509
    %v511 = vrcp.pop %v507
    %v512 = vrcp.pop %v510
    %v513 = vmul.f32 %v502, %v511
    %v514 = vmul.f32 %v504, %v512
    %515 = vrot.lane.b32.xlu0 %v330, 68
    %v516 = vpop.permute.xlu0 %515
    %vm518 = vcmask 64512
    %v520 = vsel %vm518, %v513, 0
    %522 = vmatprep.subr.mxu0 0.0
    %523 = vmatpush1.msra.mxu0 %v516
    %524 = vmatprep.subr.mxu0 0.0
    %525 = vmatpush1.msra.mxu0 0.0
    %526 = vmatprep.subr.mxu0 0.0
    %527 = vmatpush1.msra.mxu0 0.0
    %528 = vmatprep.subr.mxu0 0.0
    %529 = vmatpush1.msra.mxu0 0.0
    %530 = vmatprep.subr.mxu0 0.0
    %531 = vmatpush1.msra.mxu0 0.0
    %532 = vmatprep.subr.mxu0 0.0
    %533 = vmatpush1.msra.mxu0 0.0
    %534 = vmatprep.subr.mxu0 0.0
    %535 = vmatpush1.msra.mxu0 0.0
    %536 = vmatprep.subr.mxu0 0.0
    %537 = vmatpush1.msra.mxu0 0.0
    %538 = vmatprep.subr.mxu0 0.0
    %539 = vmatpush1.msra.mxu0 0.0
    %540 = vmatprep.subr.mxu0 0.0
    %541 = vmatpush1.msra.mxu0 0.0
    %542 = vmatprep.subr.mxu0 0.0
    %543 = vmatpush1.msra.mxu0 0.0
    %544 = vmatprep.subr.mxu0 0.0
    %545 = vmatpush1.msra.mxu0 0.0
    %546 = vmatprep.subr.mxu0 0.0
    %547 = vmatpush1.msra.mxu0 0.0
    %548 = vmatprep.subr.mxu0 0.0
    %549 = vmatpush1.msra.mxu0 0.0
    %550 = vmatprep.subr.mxu0 0.0
    %551 = vmatpush1.msra.mxu0 0.0
    %552 = vmatprep.subr.mxu0 0.0
    %553 = vmatpush1.msra.mxu0 0.0
    %554 = vmatprep.subr.mxu0 0.0
    %555 = vmatpush1.msra.mxu0 0.0
    %556 = vmatprep.subr.mxu0 0.0
    %557 = vmatpush1.msra.mxu0 0.0
    %558 = vmatprep.subr.mxu0 0.0
    %559 = vmatpush1.msra.mxu0 0.0
    %560 = vmatprep.subr.mxu0 0.0
    %561 = vmatpush1.msra.mxu0 0.0
    %562 = vmatprep.subr.mxu0 0.0
    %563 = vmatpush1.msra.mxu0 0.0
    %564 = vmatprep.subr.mxu0 0.0
    %565 = vmatpush1.msra.mxu0 0.0
    %566 = vmatprep.subr.mxu0 0.0
    %567 = vmatpush1.msra.mxu0 0.0
    %568 = vmatprep.subr.mxu0 0.0
    %569 = vmatpush1.msra.mxu0 0.0
    %570 = vmatprep.subr.mxu0 0.0
    %571 = vmatpush1.msra.mxu0 0.0
    %572 = vmatprep.subr.mxu0 0.0
    %573 = vmatpush1.msra.mxu0 0.0
    %574 = vmatprep.subr.mxu0 0.0
    %575 = vmatpush1.msra.mxu0 0.0
    %576 = vmatprep.subr.mxu0 0.0
    %577 = vmatpush1.msra.mxu0 0.0
    %578 = vmatprep.subr.mxu0 0.0
    %579 = vmatpush1.msra.mxu0 0.0
    %580 = vmatprep.subr.mxu0 0.0
    %581 = vmatpush1.msra.mxu0 0.0
    %582 = vmatprep.subr.mxu0 0.0
    %583 = vmatpush1.msra.mxu0 0.0
    %584 = vmatprep.subr.mxu0 0.0
    %585 = vmatpush1.msra.mxu0 0.0
    %586 = vmatprep.mubr.f32.mxu0 0.0
    %587 = vmatmul.mubr.f32.gmra.mrb[0].mxu0 %v520
    %v588 = vpop.f32.mrb[0].mxu0
    %v589 = vadd.f32 0.0, %v588
    %v590 = vpop.f32.mrb[0].mxu0
    %591 = vdwg.mxu0
    %592 = vrot.lane.b32.xlu0 %v335, 68
    %v593 = vpop.permute.xlu0 %592
    %v596 = vsel %vm518, %v514, 0
    %598 = vmatprep.subr.mxu0 0.0
    %599 = vmatpush1.msra.mxu0 %v593
    %600 = vmatprep.subr.mxu0 0.0
    %601 = vmatpush1.msra.mxu0 0.0
    %602 = vmatprep.subr.mxu0 0.0
    %603 = vmatpush1.msra.mxu0 0.0
    %604 = vmatprep.subr.mxu0 0.0
    %605 = vmatpush1.msra.mxu0 0.0
    %606 = vmatprep.subr.mxu0 0.0
    %607 = vmatpush1.msra.mxu0 0.0
    %608 = vmatprep.subr.mxu0 0.0
    %609 = vmatpush1.msra.mxu0 0.0
    %610 = vmatprep.subr.mxu0 0.0
    %611 = vmatpush1.msra.mxu0 0.0
    %612 = vmatprep.subr.mxu0 0.0
    %613 = vmatpush1.msra.mxu0 0.0
    %614 = vmatprep.subr.mxu0 0.0
    %615 = vmatpush1.msra.mxu0 0.0
    %616 = vmatprep.subr.mxu0 0.0
    %617 = vmatpush1.msra.mxu0 0.0
    %618 = vmatprep.subr.mxu0 0.0
    %619 = vmatpush1.msra.mxu0 0.0
    %620 = vmatprep.subr.mxu0 0.0
    %621 = vmatpush1.msra.mxu0 0.0
    %622 = vmatprep.subr.mxu0 0.0
    %623 = vmatpush1.msra.mxu0 0.0
    %624 = vmatprep.subr.mxu0 0.0
    %625 = vmatpush1.msra.mxu0 0.0
    %626 = vmatprep.subr.mxu0 0.0
    %627 = vmatpush1.msra.mxu0 0.0
    %628 = vmatprep.subr.mxu0 0.0
    %629 = vmatpush1.msra.mxu0 0.0
    %630 = vmatprep.subr.mxu0 0.0
    %631 = vmatpush1.msra.mxu0 0.0
    %632 = vmatprep.subr.mxu0 0.0
    %633 = vmatpush1.msra.mxu0 0.0
    %634 = vmatprep.subr.mxu0 0.0
    %635 = vmatpush1.msra.mxu0 0.0
    %636 = vmatprep.subr.mxu0 0.0
    %637 = vmatpush1.msra.mxu0 0.0
    %638 = vmatprep.subr.mxu0 0.0
    %639 = vmatpush1.msra.mxu0 0.0
    %640 = vmatprep.subr.mxu0 0.0
    %641 = vmatpush1.msra.mxu0 0.0
    %642 = vmatprep.subr.mxu0 0.0
    %643 = vmatpush1.msra.mxu0 0.0
    %644 = vmatprep.subr.mxu0 0.0
    %645 = vmatpush1.msra.mxu0 0.0
    %646 = vmatprep.subr.mxu0 0.0
    %647 = vmatpush1.msra.mxu0 0.0
    %648 = vmatprep.subr.mxu0 0.0
    %649 = vmatpush1.msra.mxu0 0.0
    %650 = vmatprep.subr.mxu0 0.0
    %651 = vmatpush1.msra.mxu0 0.0
    %652 = vmatprep.subr.mxu0 0.0
    %653 = vmatpush1.msra.mxu0 0.0
    %654 = vmatprep.subr.mxu0 0.0
    %655 = vmatpush1.msra.mxu0 0.0
    %656 = vmatprep.subr.mxu0 0.0
    %657 = vmatpush1.msra.mxu0 0.0
    %658 = vmatprep.subr.mxu0 0.0
    %659 = vmatpush1.msra.mxu0 0.0
    %660 = vmatprep.subr.mxu0 0.0
    %661 = vmatpush1.msra.mxu0 0.0
    %662 = vmatprep.mubr.f32.mxu0 0.0
    %663 = vmatmul.mubr.f32.gmra.mrb[0].mxu0 %v596
    %v664 = vpop.f32.mrb[0].mxu0
    %v665 = vadd.f32 0.0, %v664
    %v666 = vpop.f32.mrb[0].mxu0
    %667 = vdwg.mxu0
    %v669 = vunpack.c.l.s4 1983009808
    %v670 = vunpack.c.0.s8 %v669
    %v671 = vlaneseq
    %v672 = vshrl.u32 %v671, 7
    %v673 = vsub.s32 %v670, %v672
    %v674 = vrot.slane %v589, %v673
    %v676 = vunpack.c.l.s4 1983009808
    %v677 = vunpack.c.0.s8 %v676
    %v678 = vlaneseq
    %v679 = vshrl.u32 %v678, 7
    %v680 = vsub.s32 %v677, %v679
    %v681 = vrot.slane %v665, %v680
    %v682 = vcombine.low %v674, %v681
    %v683 = vcombine.high %v674, %v681
    %v685 = vunpack.c.l.s4 1934713408
    %v686 = vunpack.c.0.s8 %v685
    %v687 = vlaneseq
    %v688 = vshrl.u32 %v687, 7
    %v689 = vsub.s32 %v686, %v688
    %v690 = vrot.slane %v682, %v689
    %v692 = vunpack.c.l.s4 1934713408
    %v693 = vunpack.c.0.s8 %v692
    %v694 = vlaneseq
    %v695 = vshrl.u32 %v694, 7
    %v696 = vsub.s32 %v693, %v695
    %v697 = vrot.slane %v683, %v696
    %v698 = vcombine.high %v690, 0.0
    %v699 = vcombine.high %v697, 0.0
    %v700 = vld [vmem:[#allocation8] sm:$0xff]
    %v701 = vld [vmem:[#allocation8 + $0x8] sm:$0xff]
    %v702 = vld [vmem:[#allocation8 + $0x10] sm:$0xff]
    %v703 = vld [vmem:[#allocation8 + $0x18] sm:$0xff]
    %v704 = vld [vmem:[#allocation8 + $0x20] sm:$0xff]
    %v705 = vld [vmem:[#allocation8 + $0x28] sm:$0xff]
    %v706 = vld [vmem:[#allocation8 + $0x30] sm:$0xff]
    %v707 = vld [vmem:[#allocation8 + $0x38] sm:$0xf]
    %v708 = vld [vmem:[#allocation10] sm:$0x1]
    %v710 = vlaneseq
    %v711 = vshrl.u32 %v710, 7
    %v712 = vsub.s32 0, %v711
    %v713 = vrot.slane %v708, %v712
    %v719 = vcombine.low %v690, %v698
    %v720 = vcombine.low %v697, %v699
    %v722 = vunpack.c.l.s4 1983009808
    %v723 = vunpack.c.0.s8 %v722
    %v724 = vlaneseq
    %v725 = vshrl.u32 %v724, 7
    %v726 = vsub.s32 %v723, %v725
    %v727 = vrot.slane %v719, %v726
    %v729 = vunpack.c.l.s4 1983009808
    %v730 = vunpack.c.0.s8 %v729
    %v731 = vlaneseq
    %v732 = vshrl.u32 %v731, 7
    %v733 = vsub.s32 %v730, %v732
    %v734 = vrot.slane %v720, %v733
    %v735 = vcombine.low %v727, %v734
    %v736 = vsel %vm252, %v735, 0
    %v739 = vsel %vm259, %v707, 0
    %741 = vmatprep.subr.mxu0 0.0
    %742 = vmatpush1.msra.mxu0 %v700
    %743 = vmatprep.subr.mxu0 0.0
    %744 = vmatpush1.msra.mxu0 %v701
    %745 = vmatprep.subr.mxu0 0.0
    %746 = vmatpush1.msra.mxu0 %v702
    %747 = vmatprep.subr.mxu0 0.0
    %748 = vmatpush1.msra.mxu0 %v703
    %749 = vmatprep.subr.mxu0 0.0
    %750 = vmatpush1.msra.mxu0 %v704
    %751 = vmatprep.subr.mxu0 0.0
    %752 = vmatpush1.msra.mxu0 %v705
    %753 = vmatprep.subr.mxu0 0.0
    %754 = vmatpush1.msra.mxu0 %v706
    %755 = vmatprep.subr.mxu0 0.0
    %756 = vmatpush1.msra.mxu0 %v739
    %757 = vmatprep.subr.mxu0 0.0
    %758 = vmatpush1.msra.mxu0 0.0
    %759 = vmatprep.subr.mxu0 0.0
    %760 = vmatpush1.msra.mxu0 0.0
    %761 = vmatprep.subr.mxu0 0.0
    %762 = vmatpush1.msra.mxu0 0.0
    %763 = vmatprep.subr.mxu0 0.0
    %764 = vmatpush1.msra.mxu0 0.0
    %765 = vmatprep.subr.mxu0 0.0
    %766 = vmatpush1.msra.mxu0 0.0
    %767 = vmatprep.subr.mxu0 0.0
    %768 = vmatpush1.msra.mxu0 0.0
    %769 = vmatprep.subr.mxu0 0.0
    %770 = vmatpush1.msra.mxu0 0.0
    %771 = vmatprep.subr.mxu0 0.0
    %772 = vmatpush1.msra.mxu0 0.0
    %773 = vmatprep.subr.mxu0 0.0
    %774 = vmatpush1.msra.mxu0 0.0
    %775 = vmatprep.subr.mxu0 0.0
    %776 = vmatpush1.msra.mxu0 0.0
    %777 = vmatprep.subr.mxu0 0.0
    %778 = vmatpush1.msra.mxu0 0.0
    %779 = vmatprep.subr.mxu0 0.0
    %780 = vmatpush1.msra.mxu0 0.0
    %781 = vmatprep.subr.mxu0 0.0
    %782 = vmatpush1.msra.mxu0 0.0
    %783 = vmatprep.subr.mxu0 0.0
    %784 = vmatpush1.msra.mxu0 0.0
    %785 = vmatprep.subr.mxu0 0.0
    %786 = vmatpush1.msra.mxu0 0.0
    %787 = vmatprep.subr.mxu0 0.0
    %788 = vmatpush1.msra.mxu0 0.0
    %789 = vmatprep.subr.mxu0 0.0
    %790 = vmatpush1.msra.mxu0 0.0
    %791 = vmatprep.subr.mxu0 0.0
    %792 = vmatpush1.msra.mxu0 0.0
    %793 = vmatprep.subr.mxu0 0.0
    %794 = vmatpush1.msra.mxu0 0.0
    %795 = vmatprep.subr.mxu0 0.0
    %796 = vmatpush1.msra.mxu0 0.0
    %797 = vmatprep.subr.mxu0 0.0
    %798 = vmatpush1.msra.mxu0 0.0
    %799 = vmatprep.subr.mxu0 0.0
    %800 = vmatpush1.msra.mxu0 0.0
    %801 = vmatprep.subr.mxu0 0.0
    %802 = vmatpush1.msra.mxu0 0.0
    %803 = vmatprep.subr.mxu0 0.0
    %804 = vmatpush1.msra.mxu0 0.0
    %805 = vmatprep.mubr.f32.mxu0 0.0
    %806 = vmatmul.mubr.f32.gmra.mrb[0].mxu0 %v736
    %v807 = vpop.f32.mrb[0].mxu0
    %v808 = vadd.f32 %v713, %v807
    %v809 = vpop.f32.mrb[0].mxu0
    %810 = vdwg.mxu0
    %v812 = vcombine.high %v808, %v808
    %v814 = vunpack.c.l.s4 1983009808
    %v815 = vunpack.c.0.s8 %v814
    %v816 = vlaneseq
    %v817 = vshrl.u32 %v816, 7
    %v818 = vsub.s32 %v815, %v817
    %v819 = vrot.slane %v808, %v818
    %v821 = vunpack.c.l.s4 1983009808
    %v822 = vunpack.c.0.s8 %v821
    %v823 = vlaneseq
    %v824 = vshrl.u32 %v823, 7
    %v825 = vsub.s32 %v822, %v824
    %v826 = vrot.slane %v812, %v825
    %v827 = vcombine.high %v819, %v819
    %v828 = vcombine.high %v826, %v826
    %v833 = vld [vmem:[#allocation11] sm:$0xff]
    %v834 = vld [vmem:[#allocation11 + $0x8] sm:$0xff]
    %v835 = vld [vmem:[#allocation11 + $0x10] sm:$0xff]
    %v836 = vld [vmem:[#allocation11 + $0x18] sm:$0xff]
    %v837 = vld [vmem:[#allocation13] sm:$0x1]
    %v838 = vld [vmem:[#allocation2] sm:$0x3]
    %v840 = vlaneseq
    %v841 = vshrl.u32 %v840, 7
    %v842 = vsub.s32 0, %v841
    %v843 = vrot.slane %v837, %v842
    %vm845 = vcmask 261120
    %v847 = vsel %vm845, %v838, 0
    %849 = vmatprep.subr.mxu0 0.0
    %850 = vmatpush1.msra.mxu0 %v833
    %851 = vmatprep.subr.mxu0 0.0
    %852 = vmatpush1.msra.mxu0 %v834
    %853 = vmatprep.subr.mxu0 0.0
    %854 = vmatpush1.msra.mxu0 %v835
    %855 = vmatprep.subr.mxu0 0.0
    %856 = vmatpush1.msra.mxu0 %v836
    %857 = vmatprep.subr.mxu0 0.0
    %858 = vmatpush1.msra.mxu0 0.0
    %859 = vmatprep.subr.mxu0 0.0
    %860 = vmatpush1.msra.mxu0 0.0
    %861 = vmatprep.subr.mxu0 0.0
    %862 = vmatpush1.msra.mxu0 0.0
    %863 = vmatprep.subr.mxu0 0.0
    %864 = vmatpush1.msra.mxu0 0.0
    %865 = vmatprep.subr.mxu0 0.0
    %866 = vmatpush1.msra.mxu0 0.0
    %867 = vmatprep.subr.mxu0 0.0
    %868 = vmatpush1.msra.mxu0 0.0
    %869 = vmatprep.subr.mxu0 0.0
    %870 = vmatpush1.msra.mxu0 0.0
    %871 = vmatprep.subr.mxu0 0.0
    %872 = vmatpush1.msra.mxu0 0.0
    %873 = vmatprep.subr.mxu0 0.0
    %874 = vmatpush1.msra.mxu0 0.0
    %875 = vmatprep.subr.mxu0 0.0
    %876 = vmatpush1.msra.mxu0 0.0
    %877 = vmatprep.subr.mxu0 0.0
    %878 = vmatpush1.msra.mxu0 0.0
    %879 = vmatprep.subr.mxu0 0.0
    %880 = vmatpush1.msra.mxu0 0.0
    %881 = vmatprep.subr.mxu0 0.0
    %882 = vmatpush1.msra.mxu0 0.0
    %883 = vmatprep.subr.mxu0 0.0
    %884 = vmatpush1.msra.mxu0 0.0
    %885 = vmatprep.subr.mxu0 0.0
    %886 = vmatpush1.msra.mxu0 0.0
    %887 = vmatprep.subr.mxu0 0.0
    %888 = vmatpush1.msra.mxu0 0.0
    %889 = vmatprep.subr.mxu0 0.0
    %890 = vmatpush1.msra.mxu0 0.0
    %891 = vmatprep.subr.mxu0 0.0
    %892 = vmatpush1.msra.mxu0 0.0
    %893 = vmatprep.subr.mxu0 0.0
    %894 = vmatpush1.msra.mxu0 0.0
    %895 = vmatprep.subr.mxu0 0.0
    %896 = vmatpush1.msra.mxu0 0.0
    %897 = vmatprep.subr.mxu0 0.0
    %898 = vmatpush1.msra.mxu0 0.0
    %899 = vmatprep.subr.mxu0 0.0
    %900 = vmatpush1.msra.mxu0 0.0
    %901 = vmatprep.subr.mxu0 0.0
    %902 = vmatpush1.msra.mxu0 0.0
    %903 = vmatprep.subr.mxu0 0.0
    %904 = vmatpush1.msra.mxu0 0.0
    %905 = vmatprep.subr.mxu0 0.0
    %906 = vmatpush1.msra.mxu0 0.0
    %907 = vmatprep.subr.mxu0 0.0
    %908 = vmatpush1.msra.mxu0 0.0
    %909 = vmatprep.subr.mxu0 0.0
    %910 = vmatpush1.msra.mxu0 0.0
    %911 = vmatprep.subr.mxu0 0.0
    %912 = vmatpush1.msra.mxu0 0.0
    %913 = vmatprep.mubr.f32.mxu0 0.0
    %914 = vmatmul.mubr.f32.gmra.mrb[0].mxu0 %v847
    %v915 = vpop.f32.mrb[0].mxu0
    %v916 = vadd.f32 %v843, %v915
    %v917 = vpop.f32.mrb[0].mxu0
    %918 = vdwg.mxu0
    %v919 = vadd.f32 %v819, %v916
    %v920 = vxor.u32 %v919, 2147483648
    %v921 = vmul.f32 %v920, 1.442695
    %v922 = vpow.pop %v921
    %v923 = vadd.f32 %v922, 1.0
    %v924 = vrcp.pop %v923
    %v925 = vmul.f32 1.0, %v924
    %v928 = vunpack.c.l.s4 1983009808
    %v929 = vunpack.c.0.s8 %v928
    %v930 = vlaneseq
    %v931 = vshrl.u32 %v930, 7
    %v932 = vsub.s32 %v929, %v931
    %v933 = vrot.slane %v916, %v932
    %934 = vrot.lane.b32.xlu0 %v933, 64
    %v935 = vpop.permute.xlu0 %934
    %v937 = vmul.f32 %v925, %v935
    %939 = vrot.lane.b32.xlu0 %v937, 64
    %v940 = vpop.permute.xlu0 %939
    %v942 = vadd.f32 %v819, %v940
    %v943 = vtanh.pop %v942
    %v944 = vsub.f32 1.0, %v925
    %946 = vrot.lane.b32.xlu0 %v943, 96
    %v947 = vpop.permute.xlu0 %946
    %v949 = vmul.f32 %v944, %v947
    %v951 = vunpack.c.l.s4 1983009808
    %v952 = vunpack.c.0.s8 %v951
    %v953 = vlaneseq
    %v954 = vshrl.u32 %v953, 7
    %v955 = vsub.s32 %v952, %v954
    %v956 = vrot.slane %v838, %v955
    %957 = vrot.lane.b32.xlu0 %v956, 32
    %v958 = vpop.permute.xlu0 %957
    %v960 = vmul.f32 %v925, %v958
    %v961 = vadd.f32 %v949, %v960
    %v964 = vunpack.c.l.s4 1983009808
    %v965 = vunpack.c.0.s8 %v964
    %v966 = vlaneseq
    %v967 = vshrl.u32 %v966, 7
    %v968 = vsub.s32 %v965, %v967
    %v969 = vrot.slane %v961, %v968
    %970 = vrot.lane.b32.xlu0 %v969, 96
    %v971 = vpop.permute.xlu0 %970
    %v972 = vsel %vm845, %v971, 0
    %974 = vmatprep.subr.mxu0 0.0
    %975 = vmatpush1.msra.mxu0 %v833
    %976 = vmatprep.subr.mxu0 0.0
    %977 = vmatpush1.msra.mxu0 %v834
    %978 = vmatprep.subr.mxu0 0.0
    %979 = vmatpush1.msra.mxu0 %v835
    %980 = vmatprep.subr.mxu0 0.0
    %981 = vmatpush1.msra.mxu0 %v836
    %982 = vmatprep.subr.mxu0 0.0
    %983 = vmatpush1.msra.mxu0 0.0
    %984 = vmatprep.subr.mxu0 0.0
    %985 = vmatpush1.msra.mxu0 0.0
    %986 = vmatprep.subr.mxu0 0.0
    %987 = vmatpush1.msra.mxu0 0.0
    %988 = vmatprep.subr.mxu0 0.0
    %989 = vmatpush1.msra.mxu0 0.0
    %990 = vmatprep.subr.mxu0 0.0
    %991 = vmatpush1.msra.mxu0 0.0
    %992 = vmatprep.subr.mxu0 0.0
    %993 = vmatpush1.msra.mxu0 0.0
    %994 = vmatprep.subr.mxu0 0.0
    %995 = vmatpush1.msra.mxu0 0.0
    %996 = vmatprep.subr.mxu0 0.0
    %997 = vmatpush1.msra.mxu0 0.0
    %998 = vmatprep.subr.mxu0 0.0
    %999 = vmatpush1.msra.mxu0 0.0
    %1000 = vmatprep.subr.mxu0 0.0
    %1001 = vmatpush1.msra.mxu0 0.0
    %1002 = vmatprep.subr.mxu0 0.0
    %1003 = vmatpush1.msra.mxu0 0.0
    %1004 = vmatprep.subr.mxu0 0.0
    %1005 = vmatpush1.msra.mxu0 0.0
    %1006 = vmatprep.subr.mxu0 0.0
    %1007 = vmatpush1.msra.mxu0 0.0
    %1008 = vmatprep.subr.mxu0 0.0
    %1009 = vmatpush1.msra.mxu0 0.0
    %1010 = vmatprep.subr.mxu0 0.0
    %1011 = vmatpush1.msra.mxu0 0.0
    %1012 = vmatprep.subr.mxu0 0.0
    %1013 = vmatpush1.msra.mxu0 0.0
    %1014 = vmatprep.subr.mxu0 0.0
    %1015 = vmatpush1.msra.mxu0 0.0
    %1016 = vmatprep.subr.mxu0 0.0
    %1017 = vmatpush1.msra.mxu0 0.0
    %1018 = vmatprep.subr.mxu0 0.0
    %1019 = vmatpush1.msra.mxu0 0.0
    %1020 = vmatprep.subr.mxu0 0.0
    %1021 = vmatpush1.msra.mxu0 0.0
    %1022 = vmatprep.subr.mxu0 0.0
    %1023 = vmatpush1.msra.mxu0 0.0
    %1024 = vmatprep.subr.mxu0 0.0
    %1025 = vmatpush1.msra.mxu0 0.0
    %1026 = vmatprep.subr.mxu0 0.0
    %1027 = vmatpush1.msra.mxu0 0.0
    %1028 = vmatprep.subr.mxu0 0.0
    %1029 = vmatpush1.msra.mxu0 0.0
    %1030 = vmatprep.subr.mxu0 0.0
    %1031 = vmatpush1.msra.mxu0 0.0
    %1032 = vmatprep.subr.mxu0 0.0
    %1033 = vmatpush1.msra.mxu0 0.0
    %1034 = vmatprep.subr.mxu0 0.0
    %1035 = vmatpush1.msra.mxu0 0.0
    %1036 = vmatprep.subr.mxu0 0.0
    %1037 = vmatpush1.msra.mxu0 0.0
    %1038 = vmatprep.mubr.f32.mxu0 0.0
    %1039 = vmatmul.mubr.f32.gmra.mrb[0].mxu0 %v972
    %v1040 = vpop.f32.mrb[0].mxu0
    %v1041 = vadd.f32 %v843, %v1040
    %v1042 = vpop.f32.mrb[0].mxu0
    %1043 = vdwg.mxu0
    %v1044 = vadd.f32 %v827, %v1041
    %v1045 = vxor.u32 %v1044, 2147483648
    %v1046 = vmul.f32 %v1045, 1.442695
    %v1047 = vpow.pop %v1046
    %v1048 = vadd.f32 %v1047, 1.0
    %v1049 = vrcp.pop %v1048
    %v1050 = vmul.f32 1.0, %v1049
    %v1053 = vunpack.c.l.s4 1983009808
    %v1054 = vunpack.c.0.s8 %v1053
    %v1055 = vlaneseq
    %v1056 = vshrl.u32 %v1055, 7
    %v1057 = vsub.s32 %v1054, %v1056
    %v1058 = vrot.slane %v1041, %v1057
    %1059 = vrot.lane.b32.xlu0 %v1058, 64
    %v1060 = vpop.permute.xlu0 %1059
    %v1062 = vmul.f32 %v1050, %v1060
    %1064 = vrot.lane.b32.xlu0 %v1062, 64
    %v1065 = vpop.permute.xlu0 %1064
    %v1067 = vadd.f32 %v827, %v1065
    %v1068 = vtanh.pop %v1067
    %v1069 = vsub.f32 1.0, %v1050
    %1071 = vrot.lane.b32.xlu0 %v1068, 96
    %v1072 = vpop.permute.xlu0 %1071
    %v1074 = vmul.f32 %v1069, %v1072
    %v1075 = vmul.f32 %v1050, %v961
    %v1076 = vadd.f32 %v1074, %v1075
    %v1079 = vunpack.c.l.s4 1983009808
    %v1080 = vunpack.c.0.s8 %v1079
    %v1081 = vlaneseq
    %v1082 = vshrl.u32 %v1081, 7
    %v1083 = vsub.s32 %v1080, %v1082
    %v1084 = vrot.slane %v1076, %v1083
    %1085 = vrot.lane.b32.xlu0 %v1084, 96
    %v1086 = vpop.permute.xlu0 %1085
    %v1087 = vsel %vm845, %v1086, 0
    %1089 = vmatprep.subr.mxu0 0.0
    %1090 = vmatpush1.msra.mxu0 %v833
    %1091 = vmatprep.subr.mxu0 0.0
    %1092 = vmatpush1.msra.mxu0 %v834
    %1093 = vmatprep.subr.mxu0 0.0
    %1094 = vmatpush1.msra.mxu0 %v835
    %1095 = vmatprep.subr.mxu0 0.0
    %1096 = vmatpush1.msra.mxu0 %v836
    %1097 = vmatprep.subr.mxu0 0.0
    %1098 = vmatpush1.msra.mxu0 0.0
    %1099 = vmatprep.subr.mxu0 0.0
    %1100 = vmatpush1.msra.mxu0 0.0
    %1101 = vmatprep.subr.mxu0 0.0
    %1102 = vmatpush1.msra.mxu0 0.0
    %1103 = vmatprep.subr.mxu0 0.0
    %1104 = vmatpush1.msra.mxu0 0.0
    %1105 = vmatprep.subr.mxu0 0.0
    %1106 = vmatpush1.msra.mxu0 0.0
    %1107 = vmatprep.subr.mxu0 0.0
    %1108 = vmatpush1.msra.mxu0 0.0
    %1109 = vmatprep.subr.mxu0 0.0
    %1110 = vmatpush1.msra.mxu0 0.0
    %1111 = vmatprep.subr.mxu0 0.0
    %1112 = vmatpush1.msra.mxu0 0.0
    %1113 = vmatprep.subr.mxu0 0.0
    %1114 = vmatpush1.msra.mxu0 0.0
    %1115 = vmatprep.subr.mxu0 0.0
    %1116 = vmatpush1.msra.mxu0 0.0
    %1117 = vmatprep.subr.mxu0 0.0
    %1118 = vmatpush1.msra.mxu0 0.0
    %1119 = vmatprep.subr.mxu0 0.0
    %1120 = vmatpush1.msra.mxu0 0.0
    %1121 = vmatprep.subr.mxu0 0.0
    %1122 = vmatpush1.msra.mxu0 0.0
    %1123 = vmatprep.subr.mxu0 0.0
    %1124 = vmatpush1.msra.mxu0 0.0
    %1125 = vmatprep.subr.mxu0 0.0
    %1126 = vmatpush1.msra.mxu0 0.0
    %1127 = vmatprep.subr.mxu0 0.0
    %1128 = vmatpush1.msra.mxu0 0.0
    %1129 = vmatprep.subr.mxu0 0.0
    %1130 = vmatpush1.msra.mxu0 0.0
    %1131 = vmatprep.subr.mxu0 0.0
    %1132 = vmatpush1.msra.mxu0 0.0
    %1133 = vmatprep.subr.mxu0 0.0
    %1134 = vmatpush1.msra.mxu0 0.0
    %1135 = vmatprep.subr.mxu0 0.0
    %1136 = vmatpush1.msra.mxu0 0.0
    %1137 = vmatprep.subr.mxu0 0.0
    %1138 = vmatpush1.msra.mxu0 0.0
    %1139 = vmatprep.subr.mxu0 0.0
    %1140 = vmatpush1.msra.mxu0 0.0
    %1141 = vmatprep.subr.mxu0 0.0
    %1142 = vmatpush1.msra.mxu0 0.0
    %1143 = vmatprep.subr.mxu0 0.0
    %1144 = vmatpush1.msra.mxu0 0.0
    %1145 = vmatprep.subr.mxu0 0.0
    %1146 = vmatpush1.msra.mxu0 0.0
    %1147 = vmatprep.subr.mxu0 0.0
    %1148 = vmatpush1.msra.mxu0 0.0
    %1149 = vmatprep.subr.mxu0 0.0
    %1150 = vmatpush1.msra.mxu0 0.0
    %1151 = vmatprep.subr.mxu0 0.0
    %1152 = vmatpush1.msra.mxu0 0.0
    %1153 = vmatprep.mubr.f32.mxu0 0.0
    %1154 = vmatmul.mubr.f32.gmra.mrb[0].mxu0 %v1087
    %v1155 = vpop.f32.mrb[0].mxu0
    %v1156 = vadd.f32 %v843, %v1155
    %v1157 = vpop.f32.mrb[0].mxu0
    %1158 = vdwg.mxu0
    %v1159 = vadd.f32 %v826, %v1156
    %v1160 = vxor.u32 %v1159, 2147483648
    %v1161 = vmul.f32 %v1160, 1.442695
    %v1162 = vpow.pop %v1161
    %v1163 = vadd.f32 %v1162, 1.0
    %v1164 = vrcp.pop %v1163
    %v1165 = vmul.f32 1.0, %v1164
    %v1168 = vunpack.c.l.s4 1983009808
    %v1169 = vunpack.c.0.s8 %v1168
    %v1170 = vlaneseq
    %v1171 = vshrl.u32 %v1170, 7
    %v1172 = vsub.s32 %v1169, %v1171
    %v1173 = vrot.slane %v1156, %v1172
    %1174 = vrot.lane.b32.xlu0 %v1173, 64
    %v1175 = vpop.permute.xlu0 %1174
    %v1177 = vmul.f32 %v1165, %v1175
    %1179 = vrot.lane.b32.xlu0 %v1177, 64
    %v1180 = vpop.permute.xlu0 %1179
    %v1182 = vadd.f32 %v826, %v1180
    %v1183 = vtanh.pop %v1182
    %v1184 = vsub.f32 1.0, %v1165
    %1186 = vrot.lane.b32.xlu0 %v1183, 96
    %v1187 = vpop.permute.xlu0 %1186
    %v1189 = vmul.f32 %v1184, %v1187
    %v1190 = vmul.f32 %v1165, %v1076
    %v1191 = vadd.f32 %v1189, %v1190
    %v1194 = vunpack.c.l.s4 1983009808
    %v1195 = vunpack.c.0.s8 %v1194
    %v1196 = vlaneseq
    %v1197 = vshrl.u32 %v1196, 7
    %v1198 = vsub.s32 %v1195, %v1197
    %v1199 = vrot.slane %v1191, %v1198
    %1200 = vrot.lane.b32.xlu0 %v1199, 96
    %v1201 = vpop.permute.xlu0 %1200
    %v1202 = vsel %vm845, %v1201, 0
    %1204 = vmatprep.subr.mxu0 0.0
    %1205 = vmatpush1.msra.mxu0 %v833
    %1206 = vmatprep.subr.mxu0 0.0
    %1207 = vmatpush1.msra.mxu0 %v834
    %1208 = vmatprep.subr.mxu0 0.0
    %1209 = vmatpush1.msra.mxu0 %v835
    %1210 = vmatprep.subr.mxu0 0.0
    %1211 = vmatpush1.msra.mxu0 %v836
    %1212 = vmatprep.subr.mxu0 0.0
    %1213 = vmatpush1.msra.mxu0 0.0
    %1214 = vmatprep.subr.mxu0 0.0
    %1215 = vmatpush1.msra.mxu0 0.0
    %1216 = vmatprep.subr.mxu0 0.0
    %1217 = vmatpush1.msra.mxu0 0.0
    %1218 = vmatprep.subr.mxu0 0.0
    %1219 = vmatpush1.msra.mxu0 0.0
    %1220 = vmatprep.subr.mxu0 0.0
    %1221 = vmatpush1.msra.mxu0 0.0
    %1222 = vmatprep.subr.mxu0 0.0
    %1223 = vmatpush1.msra.mxu0 0.0
    %1224 = vmatprep.subr.mxu0 0.0
    %1225 = vmatpush1.msra.mxu0 0.0
    %1226 = vmatprep.subr.mxu0 0.0
    %1227 = vmatpush1.msra.mxu0 0.0
    %1228 = vmatprep.subr.mxu0 0.0
    %1229 = vmatpush1.msra.mxu0 0.0
    %1230 = vmatprep.subr.mxu0 0.0
    %1231 = vmatpush1.msra.mxu0 0.0
    %1232 = vmatprep.subr.mxu0 0.0
    %1233 = vmatpush1.msra.mxu0 0.0
    %1234 = vmatprep.subr.mxu0 0.0
    %1235 = vmatpush1.msra.mxu0 0.0
    %1236 = vmatprep.subr.mxu0 0.0
    %1237 = vmatpush1.msra.mxu0 0.0
    %1238 = vmatprep.subr.mxu0 0.0
    %1239 = vmatpush1.msra.mxu0 0.0
    %1240 = vmatprep.subr.mxu0 0.0
    %1241 = vmatpush1.msra.mxu0 0.0
    %1242 = vmatprep.subr.mxu0 0.0
    %1243 = vmatpush1.msra.mxu0 0.0
    %1244 = vmatprep.subr.mxu0 0.0
    %1245 = vmatpush1.msra.mxu0 0.0
    %1246 = vmatprep.subr.mxu0 0.0
    %1247 = vmatpush1.msra.mxu0 0.0
    %1248 = vmatprep.subr.mxu0 0.0
    %1249 = vmatpush1.msra.mxu0 0.0
    %1250 = vmatprep.subr.mxu0 0.0
    %1251 = vmatpush1.msra.mxu0 0.0
    %1252 = vmatprep.subr.mxu0 0.0
    %1253 = vmatpush1.msra.mxu0 0.0
    %1254 = vmatprep.subr.mxu0 0.0
    %1255 = vmatpush1.msra.mxu0 0.0
    %1256 = vmatprep.subr.mxu0 0.0
    %1257 = vmatpush1.msra.mxu0 0.0
    %1258 = vmatprep.subr.mxu0 0.0
    %1259 = vmatpush1.msra.mxu0 0.0
    %1260 = vmatprep.subr.mxu0 0.0
    %1261 = vmatpush1.msra.mxu0 0.0
    %1262 = vmatprep.subr.mxu0 0.0
    %1263 = vmatpush1.msra.mxu0 0.0
    %1264 = vmatprep.subr.mxu0 0.0
    %1265 = vmatpush1.msra.mxu0 0.0
    %1266 = vmatprep.subr.mxu0 0.0
    %1267 = vmatpush1.msra.mxu0 0.0
    %1268 = vmatprep.mubr.f32.mxu0 0.0
    %1269 = vmatmul.mubr.f32.gmra.mrb[0].mxu0 %v1202
    %v1270 = vpop.f32.mrb[0].mxu0
    %v1271 = vadd.f32 %v843, %v1270
    %v1272 = vpop.f32.mrb[0].mxu0
    %1273 = vdwg.mxu0
    %v1274 = vadd.f32 %v828, %v1271
    %v1275 = vxor.u32 %v1274, 2147483648
    %v1276 = vmul.f32 %v1275, 1.442695
    %v1277 = vpow.pop %v1276
    %v1278 = vadd.f32 %v1277, 1.0
    %v1279 = vrcp.pop %v1278
    %v1280 = vmul.f32 1.0, %v1279
    %v1283 = vunpack.c.l.s4 1983009808
    %v1284 = vunpack.c.0.s8 %v1283
    %v1285 = vlaneseq
    %v1286 = vshrl.u32 %v1285, 7
    %v1287 = vsub.s32 %v1284, %v1286
    %v1288 = vrot.slane %v1271, %v1287
    %1289 = vrot.lane.b32.xlu0 %v1288, 64
    %v1290 = vpop.permute.xlu0 %1289
    %v1292 = vmul.f32 %v1280, %v1290
    %1294 = vrot.lane.b32.xlu0 %v1292, 64
    %v1295 = vpop.permute.xlu0 %1294
    %v1297 = vadd.f32 %v828, %v1295
    %v1298 = vtanh.pop %v1297
    %v1299 = vsub.f32 1.0, %v1280
    %1301 = vrot.lane.b32.xlu0 %v1298, 96
    %v1302 = vpop.permute.xlu0 %1301
    %v1304 = vmul.f32 %v1299, %v1302
    %v1305 = vmul.f32 %v1280, %v1191
    %v1306 = vadd.f32 %v1304, %v1305
    %v1309 = vunpack.c.l.s4 1983009808
    %v1310 = vunpack.c.0.s8 %v1309
    %v1311 = vlaneseq
    %v1312 = vshrl.u32 %v1311, 7
    %v1313 = vsub.s32 %v1310, %v1312
    %v1314 = vrot.slane %v1306, %v1313
    %1315 = vrot.lane.b32.xlu0 %v1314, 96
    %v1316 = vpop.permute.xlu0 %1315
    %vm1318 = vcmask 254976
    %1319 = vst.msk [vmem:[#allocation17] sm:$0x3] %vm1318, %v1316
    %1320 = vrot.lane.b32.xlu0 %v961, 96
    %v1321 = vpop.permute.xlu0 %1320
    %1322 = vrot.lane.b32.xlu0 %v1076, 96
    %v1323 = vpop.permute.xlu0 %1322
    %1324 = vrot.lane.b32.xlu0 %v1191, 96
    %v1325 = vpop.permute.xlu0 %1324
    %1326 = vrot.lane.b32.xlu0 %v1306, 96
    %v1327 = vpop.permute.xlu0 %1326
    %v1332 = vcombine.low %v1321, %v1323
    %v1334 = vunpack.c.l.s4 1934713408
    %v1335 = vunpack.c.0.s8 %v1334
    %v1336 = vlaneseq
    %v1337 = vshrl.u32 %v1336, 7
    %v1338 = vsub.s32 %v1335, %v1337
    %v1339 = vrot.slane %v1332, %v1338
    %v1340 = vcombine.high %v1339, 0.0
    %v1341 = vcombine.low %v1325, %v1327
    %v1343 = vunpack.c.l.s4 1934713408
    %v1344 = vunpack.c.0.s8 %v1343
    %v1345 = vlaneseq
    %v1346 = vshrl.u32 %v1345, 7
    %v1347 = vsub.s32 %v1344, %v1346
    %v1348 = vrot.slane %v1341, %v1347
    %v1349 = vcombine.high %v1348, 0.0
    %v1350 = vld [vmem:[%s11] sm:$0xff]
    %v1351 = vld [vmem:[%s11 + $0x8] sm:$0xff]
    %v1352 = vld [vmem:[%s11 + $0x10] sm:$0xff]
    %v1353 = vld [vmem:[%s11 + $0x18] sm:$0xff]
    %v1354 = vld [vmem:[#allocation14] sm:$0x1]
    %v1356 = vlaneseq
    %v1357 = vshrl.u32 %v1356, 7
    %v1358 = vsub.s32 0, %v1357
    %v1359 = vrot.slane %v1354, %v1358
    %v1365 = vcombine.low %v1339, %v1348
    %v1366 = vcombine.low %v1340, %v1349
    %v1368 = vunpack.c.l.s4 1983009808
    %v1369 = vunpack.c.0.s8 %v1368
    %v1370 = vlaneseq
    %v1371 = vshrl.u32 %v1370, 7
    %v1372 = vsub.s32 %v1369, %v1371
    %v1373 = vrot.slane %v1365, %v1372
    %v1375 = vunpack.c.l.s4 1983009808
    %v1376 = vunpack.c.0.s8 %v1375
    %v1377 = vlaneseq
    %v1378 = vshrl.u32 %v1377, 7
    %v1379 = vsub.s32 %v1376, %v1378
    %v1380 = vrot.slane %v1366, %v1379
    %v1381 = vcombine.low %v1373, %v1380
    %v1382 = vsel %vm845, %v1381, 0
    %1384 = vmatprep.subr.mxu0 0.0
    %1385 = vmatpush1.msra.mxu0 %v1350
    %1386 = vmatprep.subr.mxu0 0.0
    %1387 = vmatpush1.msra.mxu0 %v1351
    %1388 = vmatprep.subr.mxu0 0.0
    %1389 = vmatpush1.msra.mxu0 %v1352
    %1390 = vmatprep.subr.mxu0 0.0
    %1391 = vmatpush1.msra.mxu0 %v1353
    %1392 = vmatprep.subr.mxu0 0.0
    %1393 = vmatpush1.msra.mxu0 0.0
    %1394 = vmatprep.subr.mxu0 0.0
    %1395 = vmatpush1.msra.mxu0 0.0
    %1396 = vmatprep.subr.mxu0 0.0
    %1397 = vmatpush1.msra.mxu0 0.0
    %1398 = vmatprep.subr.mxu0 0.0
    %1399 = vmatpush1.msra.mxu0 0.0
    %1400 = vmatprep.subr.mxu0 0.0
    %1401 = vmatpush1.msra.mxu0 0.0
    %1402 = vmatprep.subr.mxu0 0.0
    %1403 = vmatpush1.msra.mxu0 0.0
    %1404 = vmatprep.subr.mxu0 0.0
    %1405 = vmatpush1.msra.mxu0 0.0
    %1406 = vmatprep.subr.mxu0 0.0
    %1407 = vmatpush1.msra.mxu0 0.0
    %1408 = vmatprep.subr.mxu0 0.0
    %1409 = vmatpush1.msra.mxu0 0.0
    %1410 = vmatprep.subr.mxu0 0.0
    %1411 = vmatpush1.msra.mxu0 0.0
    %1412 = vmatprep.subr.mxu0 0.0
    %1413 = vmatpush1.msra.mxu0 0.0
    %1414 = vmatprep.subr.mxu0 0.0
    %1415 = vmatpush1.msra.mxu0 0.0
    %1416 = vmatprep.subr.mxu0 0.0
    %1417 = vmatpush1.msra.mxu0 0.0
    %1418 = vmatprep.subr.mxu0 0.0
    %1419 = vmatpush1.msra.mxu0 0.0
    %1420 = vmatprep.subr.mxu0 0.0
    %1421 = vmatpush1.msra.mxu0 0.0
    %1422 = vmatprep.subr.mxu0 0.0
    %1423 = vmatpush1.msra.mxu0 0.0
    %1424 = vmatprep.subr.mxu0 0.0
    %1425 = vmatpush1.msra.mxu0 0.0
    %1426 = vmatprep.subr.mxu0 0.0
    %1427 = vmatpush1.msra.mxu0 0.0
    %1428 = vmatprep.subr.mxu0 0.0
    %1429 = vmatpush1.msra.mxu0 0.0
    %1430 = vmatprep.subr.mxu0 0.0
    %1431 = vmatpush1.msra.mxu0 0.0
    %1432 = vmatprep.subr.mxu0 0.0
    %1433 = vmatpush1.msra.mxu0 0.0
    %1434 = vmatprep.subr.mxu0 0.0
    %1435 = vmatpush1.msra.mxu0 0.0
    %1436 = vmatprep.subr.mxu0 0.0
    %1437 = vmatpush1.msra.mxu0 0.0
    %1438 = vmatprep.subr.mxu0 0.0
    %1439 = vmatpush1.msra.mxu0 0.0
    %1440 = vmatprep.subr.mxu0 0.0
    %1441 = vmatpush1.msra.mxu0 0.0
    %1442 = vmatprep.subr.mxu0 0.0
    %1443 = vmatpush1.msra.mxu0 0.0
    %1444 = vmatprep.subr.mxu0 0.0
    %1445 = vmatpush1.msra.mxu0 0.0
    %1446 = vmatprep.subr.mxu0 0.0
    %1447 = vmatpush1.msra.mxu0 0.0
    %1448 = vmatprep.mubr.f32.mxu0 0.0
    %1449 = vmatmul.mubr.f32.gmra.mrb[0].mxu0 %v1382
    %v1450 = vpop.f32.mrb[0].mxu0
    %v1451 = vadd.f32 %v1359, %v1450
    %v1452 = vpop.f32.mrb[0].mxu0
    %1453 = vdwg.mxu0
    %vm1454 = vcmask 31744
    %1455 = vst.msk [vmem:[#allocation16] sm:$0xff] %vm1454, %v1451
    // Predicated region
    $region86: #{mental_forward.1} parent=1 // pred_check
      _
    $region87: #{mental_forward.1} parent=1 // pred_check_branch
      %1457 = sbr.rel (0) target = $region89
    $region88: #{mental_forward.1} parent=1 // pred_region
      %s1459 = ssub.s32 128, 128
      %1460 = vsyncadd [#allocation4], %s1459
      %s1462 = sshll.u32 [#allocation16], 4
      %s1463 = int_to_ptr.vmem [resolvable:$true] %s1462
      %1465 = dma.vmem_to_hbm [thread:$0]  %s1463, 128, %s13, [#allocation4]
    $region89: #{mental_forward.1} parent=1 // pred_fallthru
      _
    // Predicated region
    $region90: #{mental_forward.1} parent=1 // pred_check
      _
    $region91: #{mental_forward.1} parent=1 // pred_check_branch
      %1467 = sbr.rel (0) target = $region93
    $region92: #{mental_forward.1} parent=1 // pred_region
      %s1469 = ssub.s32 32, 32
      %1470 = vsyncadd [#allocation18], %s1469
      %s1472 = sshll.u32 [#allocation17], 4
      %s1473 = int_to_ptr.vmem [resolvable:$true] %s1472
      %1475 = dma.vmem_to_hbm [thread:$0]  %s1473, 32, %s14, [#allocation18]
    $region93: #{mental_forward.1} parent=1 // pred_fallthru
      _
    // Predicated region
    $region94: #{mental_forward.1} parent=1 // pred_check
      _
    $region95: #{mental_forward.1} parent=1 // pred_check_branch
      %1477 = sbr.rel (0) target = $region97
    $region96: #{mental_forward.1} parent=1 // pred_region
      %1478 = dma.done [#allocation4], 128
    $region97: #{mental_forward.1} parent=1 // pred_fallthru
      _
    // Predicated region
    $region98: #{mental_forward.1} parent=1 // pred_check
      _
    $region99: #{mental_forward.1} parent=1 // pred_check_branch
      %1480 = sbr.rel (0) target = $region101
    $region100: #{mental_forward.1} parent=1 // pred_region
      %1481 = dma.done [#allocation18], 32
    $region101: #{mental_forward.1} parent=1 // pred_fallthru
      _
    %1482 = vsyncpa [#allocation3], 1
    %1483 = vsyncpa [#allocation6], 1
    %1484 = vsyncpa [#allocation9], 1
    %1485 = vsyncpa [#allocation12], 1
    %1486 = vsyncpa [#allocation15], 1
    %1487 = vsyncpa [#allocation4], 1
    %1488 = vsyncpa [#allocation18], 1

</llo_original>
